<compile_context>
chip_gen: v7x
topology: tpu7x:2x2x1
jax: 0.10.0
libtpu: 0.0.40
codegen_flags: <defaults>
</compile_context>

<pallas_src>
import numpy as np
import jax
import jax.numpy as jnp
from jax.experimental import pallas as pl
from jax.experimental.pallas import tpu as pltpu


# ----------------------------- in-kernel helpers -----------------------------

def _erf(x):
    # Abramowitz & Stegun 7.1.26 rational approximation, |err| < 1.5e-7.
    a1, a2, a3, a4, a5 = 0.254829592, -0.284496736, 1.421413741, -1.453152027, 1.061405429
    p = 0.3275911
    sgn = jnp.where(x >= 0.0, 1.0, -1.0)
    ax = jnp.abs(x)
    t = 1.0 / (1.0 + p * ax)
    poly = t * (a1 + t * (a2 + t * (a3 + t * (a4 + t * a5))))
    return sgn * (1.0 - poly * jnp.exp(-ax * ax))


def _gelu_exact(x):
    # nn.GELU() default (approximate='none'): 0.5*x*(1+erf(x/sqrt(2)))
    return 0.5 * x * (1.0 + _erf(x * 0.7071067811865476))


def _layer_norm(x, gamma, beta, eps=1e-5):
    mu = jnp.mean(x, axis=-1, keepdims=True)
    var = jnp.mean(jnp.square(x - mu), axis=-1, keepdims=True)
    return (x - mu) * jax.lax.rsqrt(var + eps) * gamma + beta


# --------------------------------- fused kernel ------------------------------

def lstm_layer_kernel(dm_ref, xd_ref, ln_g, ln_b, wih_ref, lb_ref, whh_ref,
                      m1g_ref, m1b_ref, m1w1_ref, m1b1_ref, m1w2_ref, m1b2_ref,
                      m2w_ref, m2b_ref,
                      out_ref, h_sc, c_sc):
    # Grid: (graph_tile t, seq step k).  dm_ref already holds the FLIPPED
    # sequence block (index_map uses K-1-k), so step k==K-1 consumes h[0].
    k = pl.program_id(1)
    G, Np, D = xd_ref.shape
    V = whh_ref.shape[0]

    # ---- aggregation for this (tile, seq step): h_t[g] = mask[g, seq] @ x[g]
    # Masks are exact in bf16; widen and accumulate in f32 (regime is not MXU
    # bound, so the f32 matmul is free accuracy on the residual path).
    parts = [jnp.dot(dm_ref[g].astype(jnp.float32), xd_ref[g],
                     preferred_element_type=jnp.float32)
             for g in range(G)]
    h_t = parts[0] if G == 1 else jnp.concatenate(parts, axis=0)        # [R, D] f32

    @pl.when(k == 0)
    def _():
        h_sc[...] = jnp.zeros_like(h_sc)
        c_sc[...] = jnp.zeros_like(c_sc)

    # ---- LayerNorm + one LSTM step. Gate columns packed (i | f | o | g) so the
    # three sigmoid gates are one contiguous [R, 3V] lane slice.
    xn = _layer_norm(h_t, ln_g[...], ln_b[...])
    gates = (jnp.dot(xn.astype(jnp.bfloat16), wih_ref[...],
                     preferred_element_type=jnp.float32)
             + jnp.dot(h_sc[...].astype(jnp.bfloat16), whh_ref[...],
                       preferred_element_type=jnp.float32)
             + lb_ref[...])                                              # [R, 4V] f32
    sig = jax.nn.sigmoid(gates[:, :3 * V])                               # i | f | o
    g_gate = jnp.tanh(gates[:, 3 * V:])
    c = sig[:, V:2 * V] * c_sc[...] + sig[:, :V] * g_gate
    h = sig[:, 2 * V:3 * V] * jnp.tanh(c)
    h_sc[...] = h
    c_sc[...] = c

    @pl.when(k == pl.num_programs(1) - 1)
    def _():
        # The final flipped step consumed h[0]; h_t here IS h[0] for this tile.
        # MLP2 (full-glu) on the final hidden state: both linears in ONE matmul.
        hg = _gelu_exact(h).astype(jnp.bfloat16)
        ab = jnp.dot(hg, m2w_ref[...], preferred_element_type=jnp.float32) + m2b_ref[...]
        glu = ab[:, :D] * jax.nn.sigmoid(ab[:, D:])
        # MLP1 skip on h[0] (the only slice of x_skip that is consumed).
        xn0 = _layer_norm(h_t, m1g_ref[...], m1b_ref[...])
        y = jnp.dot(xn0.astype(jnp.bfloat16), m1w1_ref[...],
                    preferred_element_type=jnp.float32) + m1b1_ref[...]
        y = _gelu_exact(y)
        y = jnp.dot(y.astype(jnp.bfloat16), m1w2_ref[...],
                    preferred_element_type=jnp.float32) + m1b2_ref[...]
        out_ref[...] = glu + y + h_t


# --------------------------------- glue --------------------------------------

def _round_up(x, m):
    return ((x + m - 1) // m) * m


def to_dense_batch(node_x, graph_labels, pad_to=16):
    # Equivalent of torch_geometric.utils.to_dense_batch (labels must be sorted).
    # TODO(synk): the data-dependent bucketing stays host-side NumPy + XLA
    # scatter, so this wrapper is not jittable w.r.t. traced graph_labels.
    labels = np.asarray(graph_labels)
    B = int(labels.max()) + 1
    counts = np.bincount(labels, minlength=B)
    N = int(counts.max())
    Np = _round_up(N, pad_to)                 # sublane-friendly (also for bf16 masks)
    cum = np.concatenate([[0], np.cumsum(counts)[:-1]])
    pos = np.arange(labels.shape[0]) - cum[labels]
    dense = jnp.zeros((B, Np, node_x.shape[1]), node_x.dtype).at[labels, pos].set(node_x)
    return dense, labels, pos, N, Np


def lstm_layer_forward(node_x, graph_labels, dist_masks, params, rows_per_tile=256):
    p = params
    M, D = node_x.shape
    B, K, N, _ = dist_masks.shape
    V = p["whhT"].shape[0]
    eD = p["mlp1_w1T"].shape[1]

    # ---- to_dense_batch (host indices + XLA scatter); pad node dim ----------
    dense, idx_b, idx_n, N0, Np = to_dense_batch(node_x, graph_labels)
    assert N0 == N, "dist_masks node dim must match max nodes per graph"

    dm = dist_masks.astype(jnp.bfloat16)                  # 0/1 exact in bf16
    if Np != N:
        dm = jnp.pad(dm, ((0, 0), (0, 0), (0, Np - N), (0, Np - N)))

    # ---- group graphs into ~rows_per_tile row tiles (parallel grid axis) ----
    G = max(1, min(B, rows_per_tile // Np))               # graphs per tile
    Bp = _round_up(B, G)
    if Bp != B:                                           # pad with empty graphs
        dm = jnp.pad(dm, ((0, Bp - B), (0, 0), (0, 0), (0, 0)))
        dense = jnp.pad(dense, ((0, Bp - B), (0, 0), (0, 0)))
    T = Bp // G
    R = G * Np                                            # rows per tile
    dm = dm.reshape(Bp, K * Np, Np)                       # free (contiguous)

    # ---- VMEM budget, re-derived per review (v7x: 64 MiB/TC) ----------------
    w_bytes = sum(int(np.prod(v.shape)) * v.dtype.itemsize for v in p.values())
    blk_bytes = (2 * (G * Np * Np * 2)        # mask blocks   (bf16, double-buffered)
                 + 2 * (G * Np * D * 4)       # dense blocks  (f32,  double-buffered)
                 + 2 * (R * D * 4)            # output block
                 + 2 * (R * V * 4))           # h / c scratch
    tmp_bytes = R * (2 * D + 4 * V + 2 * D + 2 * eD) * 4  # in-kernel temporaries
    vmem_limit = int(min(64 << 20, max(32 << 20, 4 * (w_bytes + blk_bytes + tmp_bytes))))

    # Loop-invariant weights/biases: whole array resident in VMEM once
    # (no per-step DMA, no 2x double-buffer waste).
    wvmem = pl.BlockSpec(memory_space=pltpu.MemorySpace.VMEM)

    out_flat = pl.pallas_call(
        lstm_layer_kernel,
        out_shape=jax.ShapeDtypeStruct((Bp * Np, D), jnp.float32),
        grid=(T, K),
        in_specs=[
            # per-(tile, seq) distance-mask block; sequence flip via index_map.
            pl.BlockSpec((G, Np, Np), lambda t, k: (t, K - 1 - k, 0)),
            # per-tile dense node features (constant in k -> fetched once per tile).
            pl.BlockSpec((G, Np, D), lambda t, k: (t, 0, 0)),
        ] + [wvmem] * 13,
        out_specs=pl.BlockSpec((R, D), lambda t, k: (t, 0)),
        scratch_shapes=[pltpu.VMEM((R, V), jnp.float32),   # h state
                        pltpu.VMEM((R, V), jnp.float32)],  # c state
        compiler_params=pltpu.CompilerParams(
            dimension_semantics=("parallel", "arbitrary"),
            vmem_limit_bytes=vmem_limit),
    )(dm, dense,
      p["ln_g"], p["ln_b"], p["wihT"], p["lstm_b"], p["whhT"],
      p["mlp1_ln_g"], p["mlp1_ln_b"],
      p["mlp1_w1T"], p["mlp1_b1"], p["mlp1_w2T"], p["mlp1_b2"],
      p["mlp2_wT"], p["mlp2_b"])

    # ---- drop padded rows: new batch.x in original node order ----------------
    row_idx = jnp.asarray(idx_b * Np + idx_n, dtype=jnp.int32)
    return out_flat[row_idx]


# ------------------------------ parameters ------------------------------------

def init_params(key, D, V, expand=1):
    ks = jax.random.split(key, 8)

    def lin(k, out_f, in_f):
        bound = 1.0 / np.sqrt(in_f)
        kw, kb = jax.random.split(k)
        w = jax.random.uniform(kw, (out_f, in_f), jnp.float32, -bound, bound)
        b = jax.random.uniform(kb, (out_f,), jnp.float32, -bound, bound)
        return w, b

    eD = expand * D
    # MLP1 (the torch module's linear2 is Linear(D, D); only valid for expand==1)
    w1, b1 = lin(ks[0], eD, D)
    w2, b2 = lin(ks[1], D, eD)
    # LSTM (PyTorch init U(-1/sqrt(V), 1/sqrt(V)); native gate row order i,f,g,o)
    bnd = 1.0 / np.sqrt(V)
    wih = jax.random.uniform(ks[2], (4 * V, D), jnp.float32, -bnd, bnd)
    whh = jax.random.uniform(ks[3], (4 * V, V), jnp.float32, -bnd, bnd)
    bih = jax.random.uniform(ks[4], (4 * V,), jnp.float32, -bnd, bnd)
    bhh = jax.random.uniform(ks[5], (4 * V,), jnp.float32, -bnd, bnd)
    # MLP2 full-glu: two Linear(dim_v -> dim_hidden)
    mw1, mb1 = lin(ks[6], D, V)
    mw2, mb2 = lin(ks[7], D, V)

    def reorder(x):  # LSTM gate blocks (i, f, g, o) -> (i, f, o, g) along axis 0
        i, f, g, o = jnp.split(x, 4, axis=0)
        return jnp.concatenate([i, f, o, g], axis=0)

    bf = jnp.bfloat16   # MXU weight operands in bf16; biases / LN / state stay f32
    return dict(
        ln_g=jnp.ones((1, D), jnp.float32),
        ln_b=jnp.zeros((1, D), jnp.float32),
        wihT=jnp.asarray(reorder(wih).T, bf),
        whhT=jnp.asarray(reorder(whh).T, bf),
        lstm_b=(reorder(bih) + reorder(bhh)).reshape(1, -1),
        mlp1_ln_g=jnp.ones((1, D), jnp.float32),
        mlp1_ln_b=jnp.zeros((1, D), jnp.float32),
        mlp1_w1T=jnp.asarray(w1.T, bf), mlp1_b1=b1.reshape(1, -1),
        mlp1_w2T=jnp.asarray(w2.T, bf), mlp1_b2=b2.reshape(1, -1),
        # MLP2's two linears fused into one [V, 2D] weight / [1, 2D] bias.
        mlp2_wT=jnp.concatenate([jnp.asarray(mw1.T, bf), jnp.asarray(mw2.T, bf)], axis=1),
        mlp2_b=jnp.concatenate([mb1, mb2]).reshape(1, -1),
    )


# --------------------------------- main ---------------------------------------

if __name__ == "__main__":
    D = 32      # dim_hidden (node feature dim)
    V = 32      # dim_v (LSTM hidden size)
    K = 4       # number of distance masks / sequence length
    B = 2       # number of graphs
    N = 8       # max nodes per graph
    nodes_per_graph = [8, 6]
    graph_labels = np.repeat(np.arange(B), nodes_per_graph)            # [14]
    M_total = int(sum(nodes_per_graph))

    key = jax.random.PRNGKey(0)
    k_x, k_m, k_p = jax.random.split(key, 3)
    node_x = jax.random.normal(k_x, (M_total, D), jnp.float32)         # batch.x
    dist_masks = jax.random.bernoulli(k_m, 0.5, (B, K, N, N))          # bool masks

    params = init_params(k_p, D, V, expand=1)
    out = lstm_layer_forward(node_x, graph_labels, dist_masks, params)
    jax.block_until_ready(out)
    assert out.shape == (M_total, D), out.shape
    assert bool(jnp.all(jnp.isfinite(out)))
    print("KERNEL_OK")
</pallas_src>

<mosaic_0001>
module attributes {stable_mosaic.version = 11 : i64} {
  func.func @lstm_layer_kernel(%arg0: i32, %arg1: i32, %arg2: memref<2x16x16xbf16, #tpu.memory_space<vmem>>, %arg3: memref<2x16x32xf32, #tpu.memory_space<vmem>>, %arg4: memref<1x32xf32, #tpu.memory_space<vmem>>, %arg5: memref<1x32xf32, #tpu.memory_space<vmem>>, %arg6: memref<32x128xbf16, #tpu.memory_space<vmem>>, %arg7: memref<1x128xf32, #tpu.memory_space<vmem>>, %arg8: memref<32x128xbf16, #tpu.memory_space<vmem>>, %arg9: memref<1x32xf32, #tpu.memory_space<vmem>>, %arg10: memref<1x32xf32, #tpu.memory_space<vmem>>, %arg11: memref<32x32xbf16, #tpu.memory_space<vmem>>, %arg12: memref<1x32xf32, #tpu.memory_space<vmem>>, %arg13: memref<32x32xbf16, #tpu.memory_space<vmem>>, %arg14: memref<1x32xf32, #tpu.memory_space<vmem>>, %arg15: memref<32x64xbf16, #tpu.memory_space<vmem>>, %arg16: memref<1x64xf32, #tpu.memory_space<vmem>>, %arg17: memref<32x32xf32, #tpu.memory_space<vmem>>, %arg18: memref<32x32xf32, #tpu.memory_space<vmem>>, %arg19: memref<32x32xf32, #tpu.memory_space<vmem>>) attributes {dimension_semantics = [#tpu.dimension_semantics<parallel>, #tpu.dimension_semantics<arbitrary>], iteration_bounds = array<i64: 1, 4>, scalar_prefetch = 0 : i64, scratch_operands = 2 : i64, tpu.core_type = #tpu.core_type<tc>, window_params = [{transform_indices = @transform_0, window_bounds = array<i64: 2, 16, 16>}, {transform_indices = @transform_1, window_bounds = array<i64: 2, 16, 32>}, {pipeline_mode = #tpu.pipeline_mode<synchronous>, transform_indices = @transform_2, window_bounds = array<i64: 1, 32>}, {pipeline_mode = #tpu.pipeline_mode<synchronous>, transform_indices = @transform_3, window_bounds = array<i64: 1, 32>}, {pipeline_mode = #tpu.pipeline_mode<synchronous>, transform_indices = @transform_4, window_bounds = array<i64: 32, 128>}, {pipeline_mode = #tpu.pipeline_mode<synchronous>, transform_indices = @transform_5, window_bounds = array<i64: 1, 128>}, {pipeline_mode = #tpu.pipeline_mode<synchronous>, transform_indices = @transform_6, window_bounds = array<i64: 32, 128>}, {pipeline_mode = #tpu.pipeline_mode<synchronous>, transform_indices = @transform_7, window_bounds = array<i64: 1, 32>}, {pipeline_mode = #tpu.pipeline_mode<synchronous>, transform_indices = @transform_8, window_bounds = array<i64: 1, 32>}, {pipeline_mode = #tpu.pipeline_mode<synchronous>, transform_indices = @transform_9, window_bounds = array<i64: 32, 32>}, {pipeline_mode = #tpu.pipeline_mode<synchronous>, transform_indices = @transform_10, window_bounds = array<i64: 1, 32>}, {pipeline_mode = #tpu.pipeline_mode<synchronous>, transform_indices = @transform_11, window_bounds = array<i64: 32, 32>}, {pipeline_mode = #tpu.pipeline_mode<synchronous>, transform_indices = @transform_12, window_bounds = array<i64: 1, 32>}, {pipeline_mode = #tpu.pipeline_mode<synchronous>, transform_indices = @transform_13, window_bounds = array<i64: 32, 64>}, {pipeline_mode = #tpu.pipeline_mode<synchronous>, transform_indices = @transform_14, window_bounds = array<i64: 1, 64>}, {transform_indices = @transform_15, window_bounds = array<i64: 32, 32>}]} {
    %c0 = arith.constant 0 : index
    %c0_0 = arith.constant 0 : index
    %c0_1 = arith.constant 0 : index
    %0 = vector.load %arg2[%c0, %c0_0, %c0_1] : memref<2x16x16xbf16, #tpu.memory_space<vmem>>, vector<1x16x16xbf16>
    %1 = vector.shape_cast %0 : vector<1x16x16xbf16> to vector<16x16xbf16>
    %2 = arith.extf %1 : vector<16x16xbf16> to vector<16x16xf32>
    %c0_2 = arith.constant 0 : index
    %c0_3 = arith.constant 0 : index
    %c0_4 = arith.constant 0 : index
    %3 = vector.load %arg3[%c0_2, %c0_3, %c0_4] : memref<2x16x32xf32, #tpu.memory_space<vmem>>, vector<1x16x32xf32>
    %4 = vector.shape_cast %3 : vector<1x16x32xf32> to vector<16x32xf32>
    %cst = arith.constant dense<0.000000e+00> : vector<16x32xf32>
    %5 = tpu.matmul %2, %4, %cst {dimension_numbers = #tpu.dot_dimension_numbers<[1], [0], [0], [1], [0, 0, 1, 1], [], []>} : vector<16x16xf32>, vector<16x32xf32>, vector<16x32xf32> -> vector<16x32xf32>
    %c1 = arith.constant 1 : index
    %c0_5 = arith.constant 0 : index
    %c0_6 = arith.constant 0 : index
    %6 = vector.load %arg2[%c1, %c0_5, %c0_6] : memref<2x16x16xbf16, #tpu.memory_space<vmem>>, vector<1x16x16xbf16>
    %7 = vector.shape_cast %6 : vector<1x16x16xbf16> to vector<16x16xbf16>
    %8 = arith.extf %7 : vector<16x16xbf16> to vector<16x16xf32>
    %c1_7 = arith.constant 1 : index
    %c0_8 = arith.constant 0 : index
    %c0_9 = arith.constant 0 : index
    %9 = vector.load %arg3[%c1_7, %c0_8, %c0_9] : memref<2x16x32xf32, #tpu.memory_space<vmem>>, vector<1x16x32xf32>
    %10 = vector.shape_cast %9 : vector<1x16x32xf32> to vector<16x32xf32>
    %cst_10 = arith.constant dense<0.000000e+00> : vector<16x32xf32>
    %11 = tpu.matmul %8, %10, %cst_10 {dimension_numbers = #tpu.dot_dimension_numbers<[1], [0], [0], [1], [0, 0, 1, 1], [], []>} : vector<16x16xf32>, vector<16x32xf32>, vector<16x32xf32> -> vector<16x32xf32>
    %12 = tpu.concatenate %5, %11 in 0 : vector<16x32xf32>, vector<16x32xf32> -> vector<32x32xf32>
    %c0_i32 = arith.constant 0 : i32
    %13 = arith.cmpi eq, %arg1, %c0_i32 : i32
    %14 = arith.extui %13 : i1 to i32
    %c0_i32_11 = arith.constant 0 : i32
    %15 = arith.cmpi ne, %14, %c0_i32_11 : i32
    scf.if %15 {
      %cst_39 = arith.constant 0.000000e+00 : f32
      %73 = vector.broadcast %cst_39 : f32 to vector<32x32xf32>
      %c0_40 = arith.constant 0 : index
      %c0_41 = arith.constant 0 : index
      %74 = vector.load %arg18[%c0_40, %c0_41] : memref<32x32xf32, #tpu.memory_space<vmem>>, vector<32x32xf32>
      tpu.vector_store %arg18[%c0_40, %c0_41], %73 {strides = array<i32>} : memref<32x32xf32, #tpu.memory_space<vmem>>, vector<32x32xf32>,
      %cst_42 = arith.constant 0.000000e+00 : f32
      %75 = vector.broadcast %cst_42 : f32 to vector<32x32xf32>
      %c0_43 = arith.constant 0 : index
      %c0_44 = arith.constant 0 : index
      %76 = vector.load %arg19[%c0_43, %c0_44] : memref<32x32xf32, #tpu.memory_space<vmem>>, vector<32x32xf32>
      tpu.vector_store %arg19[%c0_43, %c0_44], %75 {strides = array<i32>} : memref<32x32xf32, #tpu.memory_space<vmem>>, vector<32x32xf32>,
    } else {
    }
    %c0_12 = arith.constant 0 : index
    %c0_13 = arith.constant 0 : index
    %16 = vector.load %arg4[%c0_12, %c0_13] : memref<1x32xf32, #tpu.memory_space<vmem>>, vector<1x32xf32>
    %c0_14 = arith.constant 0 : index
    %c0_15 = arith.constant 0 : index
    %17 = vector.load %arg5[%c0_14, %c0_15] : memref<1x32xf32, #tpu.memory_space<vmem>>, vector<1x32xf32>
    %cst_16 = arith.constant dense<0.000000e+00> : vector<32xf32>
    %18 = vector.multi_reduction <add>, %12, %cst_16 [1] : vector<32x32xf32> to vector<32xf32>
    %19 = vector.shape_cast %18 : vector<32xf32> to vector<32x1xf32>
    %cst_17 = arith.constant 3.200000e+01 : f32
    %20 = vector.broadcast %cst_17 : f32 to vector<32x1xf32>
    %21 = arith.divf %19, %20 : vector<32x1xf32>
    %22 = vector.broadcast %21 : vector<32x1xf32> to vector<32x32xf32>
    %23 = arith.subf %12, %22 : vector<32x32xf32>
    %24 = arith.mulf %23, %23 : vector<32x32xf32>
    %cst_18 = arith.constant dense<0.000000e+00> : vector<32xf32>
    %25 = vector.multi_reduction <add>, %24, %cst_18 [1] : vector<32x32xf32> to vector<32xf32>
    %26 = vector.shape_cast %25 : vector<32xf32> to vector<32x1xf32>
    %cst_19 = arith.constant 3.200000e+01 : f32
    %27 = vector.broadcast %cst_19 : f32 to vector<32x1xf32>
    %28 = arith.divf %26, %27 : vector<32x1xf32>
    %29 = vector.broadcast %21 : vector<32x1xf32> to vector<32x32xf32>
    %30 = arith.subf %12, %29 : vector<32x32xf32>
    %cst_20 = arith.constant 9.99999974E-6 : f32
    %31 = vector.broadcast %cst_20 : f32 to vector<32x1xf32>
    %32 = arith.addf %28, %31 : vector<32x1xf32>
    %33 = math.rsqrt %32 : vector<32x1xf32>
    %34 = vector.broadcast %33 : vector<32x1xf32> to vector<32x32xf32>
    %35 = arith.mulf %30, %34 : vector<32x32xf32>
    %36 = vector.broadcast %16 : vector<1x32xf32> to vector<32x32xf32>
    %37 = arith.mulf %35, %36 : vector<32x32xf32>
    %38 = vector.broadcast %17 : vector<1x32xf32> to vector<32x32xf32>
    %39 = arith.addf %37, %38 : vector<32x32xf32>
    %40 = arith.truncf %39 : vector<32x32xf32> to vector<32x32xbf16>
    %c0_21 = arith.constant 0 : index
    %c0_22 = arith.constant 0 : index
    %41 = vector.load %arg6[%c0_21, %c0_22] : memref<32x128xbf16, #tpu.memory_space<vmem>>, vector<32x128xbf16>
    %cst_23 = arith.constant dense<0.000000e+00> : vector<32x128xf32>
    %42 = tpu.matmul %40, %41, %cst_23 {dimension_numbers = #tpu.dot_dimension_numbers<[1], [0], [0], [1], [0, 0, 1, 1], [], []>} : vector<32x32xbf16>, vector<32x128xbf16>, vector<32x128xf32> -> vector<32x128xf32>
    %c0_24 = arith.constant 0 : index
    %c0_25 = arith.constant 0 : index
    %43 = vector.load %arg18[%c0_24, %c0_25] : memref<32x32xf32, #tpu.memory_space<vmem>>, vector<32x32xf32>
    %44 = arith.truncf %43 : vector<32x32xf32> to vector<32x32xbf16>
    %c0_26 = arith.constant 0 : index
    %c0_27 = arith.constant 0 : index
    %45 = vector.load %arg8[%c0_26, %c0_27] : memref<32x128xbf16, #tpu.memory_space<vmem>>, vector<32x128xbf16>
    %cst_28 = arith.constant dense<0.000000e+00> : vector<32x128xf32>
    %46 = tpu.matmul %44, %45, %cst_28 {dimension_numbers = #tpu.dot_dimension_numbers<[1], [0], [0], [1], [0, 0, 1, 1], [], []>} : vector<32x32xbf16>, vector<32x128xbf16>, vector<32x128xf32> -> vector<32x128xf32>
    %47 = arith.addf %42, %46 : vector<32x128xf32>
    %c0_29 = arith.constant 0 : index
    %c0_30 = arith.constant 0 : index
    %48 = vector.load %arg7[%c0_29, %c0_30] : memref<1x128xf32, #tpu.memory_space<vmem>>, vector<1x128xf32>
    %49 = vector.broadcast %48 : vector<1x128xf32> to vector<32x128xf32>
    %50 = arith.addf %47, %49 : vector<32x128xf32>
    %51 = vector.extract_strided_slice %50 {offsets = [0, 0], sizes = [32, 96], strides = [1, 1]} : vector<32x128xf32> to vector<32x96xf32>
    %52 = arith.negf %51 : vector<32x96xf32>
    %53 = math.exp %52 : vector<32x96xf32>
    %cst_31 = arith.constant 1.000000e+00 : f32
    %54 = vector.broadcast %cst_31 : f32 to vector<32x96xf32>
    %55 = arith.addf %54, %53 : vector<32x96xf32>
    %56 = arith.divf %54, %55 : vector<32x96xf32>
    %57 = vector.extract_strided_slice %50 {offsets = [0, 96], sizes = [32, 32], strides = [1, 1]} : vector<32x128xf32> to vector<32x32xf32>
    %58 = math.tanh %57 : vector<32x32xf32>
    %59 = vector.extract_strided_slice %56 {offsets = [0, 32], sizes = [32, 32], strides = [1, 1]} : vector<32x96xf32> to vector<32x32xf32>
    %c0_32 = arith.constant 0 : index
    %c0_33 = arith.constant 0 : index
    %60 = vector.load %arg19[%c0_32, %c0_33] : memref<32x32xf32, #tpu.memory_space<vmem>>, vector<32x32xf32>
    %61 = arith.mulf %59, %60 : vector<32x32xf32>
    %62 = vector.extract_strided_slice %56 {offsets = [0, 0], sizes = [32, 32], strides = [1, 1]} : vector<32x96xf32> to vector<32x32xf32>
    %63 = arith.mulf %62, %58 : vector<32x32xf32>
    %64 = arith.addf %61, %63 : vector<32x32xf32>
    %65 = vector.extract_strided_slice %56 {offsets = [0, 64], sizes = [32, 32], strides = [1, 1]} : vector<32x96xf32> to vector<32x32xf32>
    %66 = math.tanh %64 : vector<32x32xf32>
    %67 = arith.mulf %65, %66 : vector<32x32xf32>
    %c0_34 = arith.constant 0 : index
    %c0_35 = arith.constant 0 : index
    %68 = vector.load %arg18[%c0_34, %c0_35] : memref<32x32xf32, #tpu.memory_space<vmem>>, vector<32x32xf32>
    tpu.vector_store %arg18[%c0_34, %c0_35], %67 {strides = array<i32>} : memref<32x32xf32, #tpu.memory_space<vmem>>, vector<32x32xf32>,
    %c0_36 = arith.constant 0 : index
    %c0_37 = arith.constant 0 : index
    %69 = vector.load %arg19[%c0_36, %c0_37] : memref<32x32xf32, #tpu.memory_space<vmem>>, vector<32x32xf32>
    tpu.vector_store %arg19[%c0_36, %c0_37], %64 {strides = array<i32>} : memref<32x32xf32, #tpu.memory_space<vmem>>, vector<32x32xf32>,
    %c3_i32 = arith.constant 3 : i32
    %70 = arith.cmpi eq, %arg1, %c3_i32 : i32
    %71 = arith.extui %70 : i1 to i32
    %c0_i32_38 = arith.constant 0 : i32
    %72 = arith.cmpi ne, %71, %c0_i32_38 : i32
    scf.if %72 {
      %cst_39 = arith.constant 5.000000e-01 : f32
      %73 = vector.broadcast %cst_39 : f32 to vector<32x32xf32>
      %74 = arith.mulf %73, %67 : vector<32x32xf32>
      %cst_40 = arith.constant 0.707106769 : f32
      %75 = vector.broadcast %cst_40 : f32 to vector<32x32xf32>
      %76 = arith.mulf %67, %75 : vector<32x32xf32>
      %cst_41 = arith.constant 0.000000e+00 : f32
      %77 = vector.broadcast %cst_41 : f32 to vector<32x32xf32>
      %78 = arith.cmpf oge, %76, %77 : vector<32x32xf32>
      %cst_42 = arith.constant 1.000000e+00 : f32
      %cst_43 = arith.constant -1.000000e+00 : f32
      %79 = vector.broadcast %cst_42 : f32 to vector<32x32xf32>
      %80 = vector.broadcast %cst_43 : f32 to vector<32x32xf32>
      %81 = arith.select %78, %79, %80 : vector<32x32xi1>, vector<32x32xf32>
      %82 = math.absf %76 : vector<32x32xf32>
      %cst_44 = arith.constant 0.327591091 : f32
      %83 = vector.broadcast %cst_44 : f32 to vector<32x32xf32>
      %84 = arith.mulf %83, %82 : vector<32x32xf32>
      %cst_45 = arith.constant 1.000000e+00 : f32
      %85 = vector.broadcast %cst_45 : f32 to vector<32x32xf32>
      %86 = arith.addf %85, %84 : vector<32x32xf32>
      %cst_46 = arith.constant 1.000000e+00 : f32
      %87 = vector.broadcast %cst_46 : f32 to vector<32x32xf32>
      %88 = arith.divf %87, %86 : vector<32x32xf32>
      %cst_47 = arith.constant 1.06140542 : f32
      %89 = vector.broadcast %cst_47 : f32 to vector<32x32xf32>
      %90 = arith.mulf %88, %89 : vector<32x32xf32>
      %cst_48 = arith.constant -1.45315206 : f32
      %91 = vector.broadcast %cst_48 : f32 to vector<32x32xf32>
      %92 = arith.addf %91, %90 : vector<32x32xf32>
      %93 = arith.mulf %88, %92 : vector<32x32xf32>
      %cst_49 = arith.constant 1.42141378 : f32
      %94 = vector.broadcast %cst_49 : f32 to vector<32x32xf32>
      %95 = arith.addf %94, %93 : vector<32x32xf32>
      %96 = arith.mulf %88, %95 : vector<32x32xf32>
      %cst_50 = arith.constant -0.284496725 : f32
      %97 = vector.broadcast %cst_50 : f32 to vector<32x32xf32>
      %98 = arith.addf %97, %96 : vector<32x32xf32>
      %99 = arith.mulf %88, %98 : vector<32x32xf32>
      %cst_51 = arith.constant 0.254829586 : f32
      %100 = vector.broadcast %cst_51 : f32 to vector<32x32xf32>
      %101 = arith.addf %100, %99 : vector<32x32xf32>
      %102 = arith.mulf %88, %101 : vector<32x32xf32>
      %cst_52 = arith.constant 0.000000e+00 : f32
      %103 = vector.broadcast %cst_52 : f32 to vector<32x32xf32>
      %104 = arith.subf %103, %82 : vector<32x32xf32>
      %105 = arith.mulf %104, %82 : vector<32x32xf32>
      %106 = math.exp %105 : vector<32x32xf32>
      %107 = arith.mulf %102, %106 : vector<32x32xf32>
      %cst_53 = arith.constant 1.000000e+00 : f32
      %108 = vector.broadcast %cst_53 : f32 to vector<32x32xf32>
      %109 = arith.subf %108, %107 : vector<32x32xf32>
      %110 = arith.mulf %81, %109 : vector<32x32xf32>
      %cst_54 = arith.constant 1.000000e+00 : f32
      %111 = vector.broadcast %cst_54 : f32 to vector<32x32xf32>
      %112 = arith.addf %111, %110 : vector<32x32xf32>
      %113 = arith.mulf %74, %112 : vector<32x32xf32>
      %114 = arith.truncf %113 : vector<32x32xf32> to vector<32x32xbf16>
      %c0_55 = arith.constant 0 : index
      %c0_56 = arith.constant 0 : index
      %115 = vector.load %arg15[%c0_55, %c0_56] : memref<32x64xbf16, #tpu.memory_space<vmem>>, vector<32x64xbf16>
      %cst_57 = arith.constant dense<0.000000e+00> : vector<32x64xf32>
      %116 = tpu.matmul %114, %115, %cst_57 {dimension_numbers = #tpu.dot_dimension_numbers<[1], [0], [0], [1], [0, 0, 1, 1], [], []>} : vector<32x32xbf16>, vector<32x64xbf16>, vector<32x64xf32> -> vector<32x64xf32>
      %c0_58 = arith.constant 0 : index
      %c0_59 = arith.constant 0 : index
      %117 = vector.load %arg16[%c0_58, %c0_59] : memref<1x64xf32, #tpu.memory_space<vmem>>, vector<1x64xf32>
      %118 = vector.broadcast %117 : vector<1x64xf32> to vector<32x64xf32>
      %119 = arith.addf %116, %118 : vector<32x64xf32>
      %120 = vector.extract_strided_slice %119 {offsets = [0, 0], sizes = [32, 32], strides = [1, 1]} : vector<32x64xf32> to vector<32x32xf32>
      %121 = vector.extract_strided_slice %119 {offsets = [0, 32], sizes = [32, 32], strides = [1, 1]} : vector<32x64xf32> to vector<32x32xf32>
      %122 = arith.negf %121 : vector<32x32xf32>
      %123 = math.exp %122 : vector<32x32xf32>
      %cst_60 = arith.constant 1.000000e+00 : f32
      %124 = vector.broadcast %cst_60 : f32 to vector<32x32xf32>
      %125 = arith.addf %124, %123 : vector<32x32xf32>
      %126 = arith.divf %124, %125 : vector<32x32xf32>
      %127 = arith.mulf %120, %126 : vector<32x32xf32>
      %c0_61 = arith.constant 0 : index
      %c0_62 = arith.constant 0 : index
      %128 = vector.load %arg9[%c0_61, %c0_62] : memref<1x32xf32, #tpu.memory_space<vmem>>, vector<1x32xf32>
      %c0_63 = arith.constant 0 : index
      %c0_64 = arith.constant 0 : index
      %129 = vector.load %arg10[%c0_63, %c0_64] : memref<1x32xf32, #tpu.memory_space<vmem>>, vector<1x32xf32>
      %cst_65 = arith.constant dense<0.000000e+00> : vector<32xf32>
      %130 = vector.multi_reduction <add>, %12, %cst_65 [1] : vector<32x32xf32> to vector<32xf32>
      %131 = vector.shape_cast %130 : vector<32xf32> to vector<32x1xf32>
      %cst_66 = arith.constant 3.200000e+01 : f32
      %132 = vector.broadcast %cst_66 : f32 to vector<32x1xf32>
      %133 = arith.divf %131, %132 : vector<32x1xf32>
      %134 = vector.broadcast %133 : vector<32x1xf32> to vector<32x32xf32>
      %135 = arith.subf %12, %134 : vector<32x32xf32>
      %136 = arith.mulf %135, %135 : vector<32x32xf32>
      %cst_67 = arith.constant dense<0.000000e+00> : vector<32xf32>
      %137 = vector.multi_reduction <add>, %136, %cst_67 [1] : vector<32x32xf32> to vector<32xf32>
      %138 = vector.shape_cast %137 : vector<32xf32> to vector<32x1xf32>
      %cst_68 = arith.constant 3.200000e+01 : f32
      %139 = vector.broadcast %cst_68 : f32 to vector<32x1xf32>
      %140 = arith.divf %138, %139 : vector<32x1xf32>
      %141 = vector.broadcast %133 : vector<32x1xf32> to vector<32x32xf32>
      %142 = arith.subf %12, %141 : vector<32x32xf32>
      %cst_69 = arith.constant 9.99999974E-6 : f32
      %143 = vector.broadcast %cst_69 : f32 to vector<32x1xf32>
      %144 = arith.addf %140, %143 : vector<32x1xf32>
      %145 = math.rsqrt %144 : vector<32x1xf32>
      %146 = vector.broadcast %145 : vector<32x1xf32> to vector<32x32xf32>
      %147 = arith.mulf %142, %146 : vector<32x32xf32>
      %148 = vector.broadcast %128 : vector<1x32xf32> to vector<32x32xf32>
      %149 = arith.mulf %147, %148 : vector<32x32xf32>
      %150 = vector.broadcast %129 : vector<1x32xf32> to vector<32x32xf32>
      %151 = arith.addf %149, %150 : vector<32x32xf32>
      %152 = arith.truncf %151 : vector<32x32xf32> to vector<32x32xbf16>
      %c0_70 = arith.constant 0 : index
      %c0_71 = arith.constant 0 : index
      %153 = vector.load %arg11[%c0_70, %c0_71] : memref<32x32xbf16, #tpu.memory_space<vmem>>, vector<32x32xbf16>
      %cst_72 = arith.constant dense<0.000000e+00> : vector<32x32xf32>
      %154 = tpu.matmul %152, %153, %cst_72 {dimension_numbers = #tpu.dot_dimension_numbers<[1], [0], [0], [1], [0, 0, 1, 1], [], []>} : vector<32x32xbf16>, vector<32x32xbf16>, vector<32x32xf32> -> vector<32x32xf32>
      %c0_73 = arith.constant 0 : index
      %c0_74 = arith.constant 0 : index
      %155 = vector.load %arg12[%c0_73, %c0_74] : memref<1x32xf32, #tpu.memory_space<vmem>>, vector<1x32xf32>
      %156 = vector.broadcast %155 : vector<1x32xf32> to vector<32x32xf32>
      %157 = arith.addf %154, %156 : vector<32x32xf32>
      %cst_75 = arith.constant 5.000000e-01 : f32
      %158 = vector.broadcast %cst_75 : f32 to vector<32x32xf32>
      %159 = arith.mulf %158, %157 : vector<32x32xf32>
      %cst_76 = arith.constant 0.707106769 : f32
      %160 = vector.broadcast %cst_76 : f32 to vector<32x32xf32>
      %161 = arith.mulf %157, %160 : vector<32x32xf32>
      %cst_77 = arith.constant 0.000000e+00 : f32
      %162 = vector.broadcast %cst_77 : f32 to vector<32x32xf32>
      %163 = arith.cmpf oge, %161, %162 : vector<32x32xf32>
      %cst_78 = arith.constant 1.000000e+00 : f32
      %cst_79 = arith.constant -1.000000e+00 : f32
      %164 = vector.broadcast %cst_78 : f32 to vector<32x32xf32>
      %165 = vector.broadcast %cst_79 : f32 to vector<32x32xf32>
      %166 = arith.select %163, %164, %165 : vector<32x32xi1>, vector<32x32xf32>
      %167 = math.absf %161 : vector<32x32xf32>
      %cst_80 = arith.constant 0.327591091 : f32
      %168 = vector.broadcast %cst_80 : f32 to vector<32x32xf32>
      %169 = arith.mulf %168, %167 : vector<32x32xf32>
      %cst_81 = arith.constant 1.000000e+00 : f32
      %170 = vector.broadcast %cst_81 : f32 to vector<32x32xf32>
      %171 = arith.addf %170, %169 : vector<32x32xf32>
      %cst_82 = arith.constant 1.000000e+00 : f32
      %172 = vector.broadcast %cst_82 : f32 to vector<32x32xf32>
      %173 = arith.divf %172, %171 : vector<32x32xf32>
      %cst_83 = arith.constant 1.06140542 : f32
      %174 = vector.broadcast %cst_83 : f32 to vector<32x32xf32>
      %175 = arith.mulf %173, %174 : vector<32x32xf32>
      %cst_84 = arith.constant -1.45315206 : f32
      %176 = vector.broadcast %cst_84 : f32 to vector<32x32xf32>
      %177 = arith.addf %176, %175 : vector<32x32xf32>
      %178 = arith.mulf %173, %177 : vector<32x32xf32>
      %cst_85 = arith.constant 1.42141378 : f32
      %179 = vector.broadcast %cst_85 : f32 to vector<32x32xf32>
      %180 = arith.addf %179, %178 : vector<32x32xf32>
      %181 = arith.mulf %173, %180 : vector<32x32xf32>
      %cst_86 = arith.constant -0.284496725 : f32
      %182 = vector.broadcast %cst_86 : f32 to vector<32x32xf32>
      %183 = arith.addf %182, %181 : vector<32x32xf32>
      %184 = arith.mulf %173, %183 : vector<32x32xf32>
      %cst_87 = arith.constant 0.254829586 : f32
      %185 = vector.broadcast %cst_87 : f32 to vector<32x32xf32>
      %186 = arith.addf %185, %184 : vector<32x32xf32>
      %187 = arith.mulf %173, %186 : vector<32x32xf32>
      %cst_88 = arith.constant 0.000000e+00 : f32
      %188 = vector.broadcast %cst_88 : f32 to vector<32x32xf32>
      %189 = arith.subf %188, %167 : vector<32x32xf32>
      %190 = arith.mulf %189, %167 : vector<32x32xf32>
      %191 = math.exp %190 : vector<32x32xf32>
      %192 = arith.mulf %187, %191 : vector<32x32xf32>
      %cst_89 = arith.constant 1.000000e+00 : f32
      %193 = vector.broadcast %cst_89 : f32 to vector<32x32xf32>
      %194 = arith.subf %193, %192 : vector<32x32xf32>
      %195 = arith.mulf %166, %194 : vector<32x32xf32>
      %cst_90 = arith.constant 1.000000e+00 : f32
      %196 = vector.broadcast %cst_90 : f32 to vector<32x32xf32>
      %197 = arith.addf %196, %195 : vector<32x32xf32>
      %198 = arith.mulf %159, %197 : vector<32x32xf32>
      %199 = arith.truncf %198 : vector<32x32xf32> to vector<32x32xbf16>
      %c0_91 = arith.constant 0 : index
      %c0_92 = arith.constant 0 : index
      %200 = vector.load %arg13[%c0_91, %c0_92] : memref<32x32xbf16, #tpu.memory_space<vmem>>, vector<32x32xbf16>
      %cst_93 = arith.constant dense<0.000000e+00> : vector<32x32xf32>
      %201 = tpu.matmul %199, %200, %cst_93 {dimension_numbers = #tpu.dot_dimension_numbers<[1], [0], [0], [1], [0, 0, 1, 1], [], []>} : vector<32x32xbf16>, vector<32x32xbf16>, vector<32x32xf32> -> vector<32x32xf32>
      %c0_94 = arith.constant 0 : index
      %c0_95 = arith.constant 0 : index
      %202 = vector.load %arg14[%c0_94, %c0_95] : memref<1x32xf32, #tpu.memory_space<vmem>>, vector<1x32xf32>
      %203 = vector.broadcast %202 : vector<1x32xf32> to vector<32x32xf32>
      %204 = arith.addf %201, %203 : vector<32x32xf32>
      %205 = arith.addf %127, %204 : vector<32x32xf32>
      %206 = arith.addf %205, %12 : vector<32x32xf32>
      %c0_96 = arith.constant 0 : index
      %c0_97 = arith.constant 0 : index
      %207 = vector.load %arg17[%c0_96, %c0_97] : memref<32x32xf32, #tpu.memory_space<vmem>>, vector<32x32xf32>
      tpu.vector_store %arg17[%c0_96, %c0_97], %206 {strides = array<i32>} : memref<32x32xf32, #tpu.memory_space<vmem>>, vector<32x32xf32>,
    } else {
    }
    return
  }
  func.func @transform_0(%arg0: i32, %arg1: i32) -> (i32, i32, i32) {
    %c3_i32 = arith.constant 3 : i32
    %0 = arith.subi %c3_i32, %arg1 : i32
    %c0_i32 = arith.constant 0 : i32
    %c0_i32_0 = arith.constant 0 : i32
    return %arg0, %0, %c0_i32 : i32, i32, i32
  }
  func.func @transform_1(%arg0: i32, %arg1: i32) -> (i32, i32, i32) {
    %c0_i32 = arith.constant 0 : i32
    %c0_i32_0 = arith.constant 0 : i32
    %c0_i32_1 = arith.constant 0 : i32
    return %arg0, %c0_i32, %c0_i32_0 : i32, i32, i32
  }
  func.func @transform_2(%arg0: i32, %arg1: i32) -> (i32, i32) {
    %c0_i32 = arith.constant 0 : i32
    %c0_i32_0 = arith.constant 0 : i32
    %c0_i32_1 = arith.constant 0 : i32
    return %c0_i32, %c0_i32_0 : i32, i32
  }
  func.func @transform_3(%arg0: i32, %arg1: i32) -> (i32, i32) {
    %c0_i32 = arith.constant 0 : i32
    %c0_i32_0 = arith.constant 0 : i32
    %c0_i32_1 = arith.constant 0 : i32
    return %c0_i32, %c0_i32_0 : i32, i32
  }
  func.func @transform_4(%arg0: i32, %arg1: i32) -> (i32, i32) {
    %c0_i32 = arith.constant 0 : i32
    %c0_i32_0 = arith.constant 0 : i32
    %c0_i32_1 = arith.constant 0 : i32
    return %c0_i32, %c0_i32_0 : i32, i32
  }
  func.func @transform_5(%arg0: i32, %arg1: i32) -> (i32, i32) {
    %c0_i32 = arith.constant 0 : i32
    %c0_i32_0 = arith.constant 0 : i32
    %c0_i32_1 = arith.constant 0 : i32
    return %c0_i32, %c0_i32_0 : i32, i32
  }
  func.func @transform_6(%arg0: i32, %arg1: i32) -> (i32, i32) {
    %c0_i32 = arith.constant 0 : i32
    %c0_i32_0 = arith.constant 0 : i32
    %c0_i32_1 = arith.constant 0 : i32
    return %c0_i32, %c0_i32_0 : i32, i32
  }
  func.func @transform_7(%arg0: i32, %arg1: i32) -> (i32, i32) {
    %c0_i32 = arith.constant 0 : i32
    %c0_i32_0 = arith.constant 0 : i32
    %c0_i32_1 = arith.constant 0 : i32
    return %c0_i32, %c0_i32_0 : i32, i32
  }
  func.func @transform_8(%arg0: i32, %arg1: i32) -> (i32, i32) {
    %c0_i32 = arith.constant 0 : i32
    %c0_i32_0 = arith.constant 0 : i32
    %c0_i32_1 = arith.constant 0 : i32
    return %c0_i32, %c0_i32_0 : i32, i32
  }
  func.func @transform_9(%arg0: i32, %arg1: i32) -> (i32, i32) {
    %c0_i32 = arith.constant 0 : i32
    %c0_i32_0 = arith.constant 0 : i32
    %c0_i32_1 = arith.constant 0 : i32
    return %c0_i32, %c0_i32_0 : i32, i32
  }
  func.func @transform_10(%arg0: i32, %arg1: i32) -> (i32, i32) {
    %c0_i32 = arith.constant 0 : i32
    %c0_i32_0 = arith.constant 0 : i32
    %c0_i32_1 = arith.constant 0 : i32
    return %c0_i32, %c0_i32_0 : i32, i32
  }
  func.func @transform_11(%arg0: i32, %arg1: i32) -> (i32, i32) {
    %c0_i32 = arith.constant 0 : i32
    %c0_i32_0 = arith.constant 0 : i32
    %c0_i32_1 = arith.constant 0 : i32
    return %c0_i32, %c0_i32_0 : i32, i32
  }
  func.func @transform_12(%arg0: i32, %arg1: i32) -> (i32, i32) {
    %c0_i32 = arith.constant 0 : i32
    %c0_i32_0 = arith.constant 0 : i32
    %c0_i32_1 = arith.constant 0 : i32
    return %c0_i32, %c0_i32_0 : i32, i32
  }
  func.func @transform_13(%arg0: i32, %arg1: i32) -> (i32, i32) {
    %c0_i32 = arith.constant 0 : i32
    %c0_i32_0 = arith.constant 0 : i32
    %c0_i32_1 = arith.constant 0 : i32
    return %c0_i32, %c0_i32_0 : i32, i32
  }
  func.func @transform_14(%arg0: i32, %arg1: i32) -> (i32, i32) {
    %c0_i32 = arith.constant 0 : i32
    %c0_i32_0 = arith.constant 0 : i32
    %c0_i32_1 = arith.constant 0 : i32
    return %c0_i32, %c0_i32_0 : i32, i32
  }
  func.func @transform_15(%arg0: i32, %arg1: i32) -> (i32, i32) {
    %c0_i32 = arith.constant 0 : i32
    %c0_i32_0 = arith.constant 0 : i32
    return %arg0, %c0_i32 : i32, i32
  }
}

</mosaic_0001>

<llo_original>
// kernel: tpu_custom_call.1
$region0: #{tpu_custom_call.1}
  #allocation0 [shape = 'u32[]', space=smem, size = 0x4, offset = 0x4, fixed_abs, tag = 'smem constant byte address 0x4 - core index']
  #allocation1 [shape = 'u32[144,128]{1,0:T(1,128)}', space=vmem, size = 0x12000, scoped, tag = 'internal scratch']
  #allocation2 [shape = 'f32[32,32]{1,0:T(8,128)}', space=vmem, size = 0x4000, scoped, tag = 'scratch operand']
  #allocation3 [shape = 'f32[32,32]{1,0:T(8,128)}', space=vmem, size = 0x4000, scoped, tag = 'scratch operand']
  %s0 = inlined_call_operand.vmem [shape: bf16[2,64,16], index: 0, kind: input, shape index: {}]
  %s1 = inlined_call_operand.vmem [shape: f32[2,16,32], index: 1, kind: input, shape index: {}]
  %s2 = inlined_call_operand.vmem [shape: f32[1,32], index: 2, kind: input, shape index: {}]
  %s3 = inlined_call_operand.vmem [shape: f32[1,32], index: 3, kind: input, shape index: {}]
  %s4 = inlined_call_operand.vmem [shape: bf16[32,128], index: 4, kind: input, shape index: {}]
  %s5 = inlined_call_operand.hbm [shape: f32[1,128], index: 5, kind: input, shape index: {}]
  %s6 = inlined_call_operand.vmem [shape: bf16[32,128], index: 6, kind: input, shape index: {}]
  %s7 = inlined_call_operand.hbm [shape: f32[1,32], index: 7, kind: input, shape index: {}]
  %s8 = inlined_call_operand.hbm [shape: f32[1,32], index: 8, kind: input, shape index: {}]
  %s9 = inlined_call_operand.vmem [shape: bf16[32,32], index: 9, kind: input, shape index: {}]
  %s10 = inlined_call_operand.vmem [shape: f32[1,32], index: 10, kind: input, shape index: {}]
  %s11 = inlined_call_operand.vmem [shape: bf16[32,32], index: 11, kind: input, shape index: {}]
  %s12 = inlined_call_operand.vmem [shape: f32[1,32], index: 12, kind: input, shape index: {}]
  %s13 = inlined_call_operand.vmem [shape: bf16[32,64], index: 13, kind: input, shape index: {}]
  %s14 = inlined_call_operand.vmem [shape: f32[1,64], index: 14, kind: input, shape index: {}]
  %s15 = inlined_call_operand.hbm [shape: f32[32,32], index: 15, kind: output, shape index: {}]
  %s16 = sld [smem:[#allocation0]]
  $region154: #{tpu_custom_call.1} parent=0
    _
  %s18 = ssub.s32 1, %s16
  %s19 = scalar_select 0, %s18, %s16
  $region1: #{tpu_custom_call.1} parent=0
    #allocation4 [shape = 'u8[16384]{0}', space=vmem, size = 0x4000, scoped, tag = 'input window, operand 0']
    #allocation5 [shape = 'u8[512]{0}', space=vmem, size = 0x400, scoped, tag = 'input window, operand 5, single buffered']
    #allocation6 [shape = 's32[2]{0}', space=sflag, size = 0x8, scoped, tag = 'scoped memory for tpu_custom_call.1']
    #allocation7 [shape = 's32[2]{0}', space=sflag, size = 0x8, scoped, tag = 'scoped memory for tpu_custom_call.1']
    #allocation8 [shape = 'u8[512]{0}', space=vmem, size = 0x400, scoped, tag = 'input window, operand 7, single buffered']
    #allocation9 [shape = 's32[1]{0}', space=sflag, size = 0x4, scoped, tag = 'scoped memory for tpu_custom_call.1']
    #allocation10 [shape = 'u8[512]{0}', space=vmem, size = 0x400, scoped, tag = 'input window, operand 8, single buffered']
    #allocation11 [shape = 'u8[16384]{0}', space=vmem, size = 0x4000, scoped, tag = 'output window, operand 0, single buffered']
    %20 = vsyncpa [#allocation6], 0
    %21 = vsyncpa [#allocation9], 0
    %22 = vsyncpa [#allocation7], 0
    loop: start=0, step=1, limit=6
    $region2: #{tpu_custom_call.1} parent=1 // loop_pre_header
      _
    $region3: #{tpu_custom_call.1} parent=1 // loop_header
      %s24 = sphi 0, %s28
      %p25 = scmp.ge.s32.totalorder %s24, 6
      %s31 = sphi 0, %s43
      %s32 = sphi 0, %s39
      %s33 = sphi 0, %s31
      %s34 = sphi 0, %s32
      %s35 = sphi 0, %s33
      %s36 = sphi 0, %s34
      %s50 = sphi 0, %s52
      %s53 = sphi 0, %s50
      %s54 = sphi 0, %s53
      %s70 = sphi 0, %s54
      %s76 = sphi 0, %s78
      %s79 = sphi 0, %s76
      %s80 = sphi 0, %s79
      %s96 = sphi 0, %s80
      %s100 = sphi 0, %s100
      %s102 = sphi 0, %s100
      %s103 = sphi 0, %s102
      %s117 = sphi 0, %s103
      %s121 = sphi 0, %s121
      %s123 = sphi 0, %s121
      %s124 = sphi 0, %s123
      %s138 = sphi 0, %s124
      %s142 = sphi 0, %s142
      %s144 = sphi 0, %s142
      %s145 = sphi 0, %s144
      %s159 = sphi 0, %s145
      %s163 = sphi 0, %s163
      %s165 = sphi 0, %s163
      %s166 = sphi 0, %s165
      %s180 = sphi 0, %s166
      %s184 = sphi 0, %s184
      %s186 = sphi 0, %s184
      %s187 = sphi 0, %s186
      %s201 = sphi 0, %s187
      %s205 = sphi 0, %s205
      %s207 = sphi 0, %s205
      %s208 = sphi 0, %s207
      %s222 = sphi 0, %s208
      %s226 = sphi 0, %s226
      %s228 = sphi 0, %s226
      %s229 = sphi 0, %s228
      %s243 = sphi 0, %s229
      %s247 = sphi 0, %s247
      %s249 = sphi 0, %s247
      %s250 = sphi 0, %s249
      %s264 = sphi 0, %s250
      %s268 = sphi 0, %s268
      %s270 = sphi 0, %s268
      %s271 = sphi 0, %s270
      %s285 = sphi 0, %s271
      %s289 = sphi 0, %s289
      %s291 = sphi 0, %s289
      %s292 = sphi 0, %s291
      %s306 = sphi 0, %s292
      %s310 = sphi 0, %s310
      %s312 = sphi 0, %s310
      %s313 = sphi 0, %s312
      %s327 = sphi 0, %s313
      %s331 = sphi 0, %s331
      %s333 = sphi 0, %s331
      %s334 = sphi 0, %s333
      %s348 = sphi 0, %s334
      %s352 = sphi 0, %s352
      %s354 = sphi 0, %s352
      %s355 = sphi 0, %s354
      %s369 = sphi 0, %s355
      %s375 = sphi 0, %s377
      %s378 = sphi 0, %s375
      %s379 = sphi 0, %s378
      %s395 = sphi 0, %s379
    $region4: #{tpu_custom_call.1} parent=1 // loop_header_branch
      %27 = sbr.rel (%p25) target = $region8
    $region5: #{tpu_custom_call.1} parent=1 // loop_body
      %s29 = ssub.s32 %s24, 1
      %s30 = ssub.s32 %s24, 2
      %s37 = sadd.s32 1, %s32
      %p38 = scmp.ge.s32.totalorder %s37, 4
      %s39 = scalar_select %p38, 0, %s37
      %s40 = sadd.s32 1, %s31
      %s41 = scalar_select %p38, %s40, %s31
      %p42 = scmp.ge.s32.totalorder %s41, 1
      %s43 = scalar_select %p42, 0, %s41
      %s44 = ssub.s32 3, %s32
      %s45 = ssub.s32 3, %s39
      %s46 = ssub.s32 %s31, %s43
      %s47 = ssub.s32 %s44, %s45
      %s48 = sor.u32 %s46, %s47
      %p49 = scmp.eq.s32.totalorder %s48, 0
      %s51 = sadd.s32 %s50, 1
      %s52 = scalar_select %p49, %s50, %s51
      %p55 = pneg %p49
      %p56 = scmp.eq.s32.totalorder %s24, 3
      %p57 = por %p55, %p56
      %p58 = scmp.ne.s32.totalorder %s50, %s53
      %p59 = scmp.eq.s32.totalorder %s24, 0
      %p60 = por %p58, %p59
      %p61 = scmp.ne.s32.totalorder %s50, %s53
      %p62 = scmp.eq.s32.totalorder %s29, 3
      %p63 = por %p61, %p62
      %p64 = scmp.ne.s32.totalorder %s53, %s54
      %p65 = scmp.eq.s32.totalorder %s29, 0
      %p66 = por %p64, %p65
      %p67 = scmp.ne.s32.totalorder %s53, %s54
      %p68 = scmp.eq.s32.totalorder %s30, 3
      %p69 = por %p67, %p68
      %p71 = scmp.ne.s32.totalorder %s54, %s70
      %p72 = scmp.eq.s32.totalorder %s30, 0
      %p73 = por %p71, %p72
      %s74 = ssub.s32 %s31, %s43
      %p75 = scmp.eq.s32.totalorder %s74, 0
      %s77 = sadd.s32 %s76, 1
      %s78 = scalar_select %p75, %s76, %s77
      %p81 = pneg %p75
      %p82 = scmp.eq.s32.totalorder %s24, 3
      %p83 = por %p81, %p82
      %p84 = scmp.ne.s32.totalorder %s76, %s79
      %p85 = scmp.eq.s32.totalorder %s24, 0
      %p86 = por %p84, %p85
      %p87 = scmp.ne.s32.totalorder %s76, %s79
      %p88 = scmp.eq.s32.totalorder %s29, 3
      %p89 = por %p87, %p88
      %p90 = scmp.ne.s32.totalorder %s79, %s80
      %p91 = scmp.eq.s32.totalorder %s29, 0
      %p92 = por %p90, %p91
      %p93 = scmp.ne.s32.totalorder %s79, %s80
      %p94 = scmp.eq.s32.totalorder %s30, 3
      %p95 = por %p93, %p94
      %p97 = scmp.ne.s32.totalorder %s80, %s96
      %p98 = scmp.eq.s32.totalorder %s30, 0
      %p99 = por %p97, %p98
      %s101 = sadd.s32 %s100, 1
      %p104 = scmp.eq.s32.totalorder %s24, 3
      %p105 = scmp.ne.s32.totalorder %s100, %s102
      %p106 = scmp.eq.s32.totalorder %s24, 0
      %p107 = por %p105, %p106
      %p108 = scmp.ne.s32.totalorder %s100, %s102
      %p109 = scmp.eq.s32.totalorder %s29, 3
      %p110 = por %p108, %p109
      %p111 = scmp.ne.s32.totalorder %s102, %s103
      %p112 = scmp.eq.s32.totalorder %s29, 0
      %p113 = por %p111, %p112
      %p114 = scmp.ne.s32.totalorder %s102, %s103
      %p115 = scmp.eq.s32.totalorder %s30, 3
      %p116 = por %p114, %p115
      %p118 = scmp.ne.s32.totalorder %s103, %s117
      %p119 = scmp.eq.s32.totalorder %s30, 0
      %p120 = por %p118, %p119
      %s122 = sadd.s32 %s121, 1
      %p125 = scmp.eq.s32.totalorder %s24, 3
      %p126 = scmp.ne.s32.totalorder %s121, %s123
      %p127 = scmp.eq.s32.totalorder %s24, 0
      %p128 = por %p126, %p127
      %p129 = scmp.ne.s32.totalorder %s121, %s123
      %p130 = scmp.eq.s32.totalorder %s29, 3
      %p131 = por %p129, %p130
      %p132 = scmp.ne.s32.totalorder %s123, %s124
      %p133 = scmp.eq.s32.totalorder %s29, 0
      %p134 = por %p132, %p133
      %p135 = scmp.ne.s32.totalorder %s123, %s124
      %p136 = scmp.eq.s32.totalorder %s30, 3
      %p137 = por %p135, %p136
      %p139 = scmp.ne.s32.totalorder %s124, %s138
      %p140 = scmp.eq.s32.totalorder %s30, 0
      %p141 = por %p139, %p140
      %s143 = sadd.s32 %s142, 1
      %p146 = scmp.eq.s32.totalorder %s24, 3
      %p147 = scmp.ne.s32.totalorder %s142, %s144
      %p148 = scmp.eq.s32.totalorder %s24, 0
      %p149 = por %p147, %p148
      %p150 = scmp.ne.s32.totalorder %s142, %s144
      %p151 = scmp.eq.s32.totalorder %s29, 3
      %p152 = por %p150, %p151
      %p153 = scmp.ne.s32.totalorder %s144, %s145
      %p154 = scmp.eq.s32.totalorder %s29, 0
      %p155 = por %p153, %p154
      %p156 = scmp.ne.s32.totalorder %s144, %s145
      %p157 = scmp.eq.s32.totalorder %s30, 3
      %p158 = por %p156, %p157
      %p160 = scmp.ne.s32.totalorder %s145, %s159
      %p161 = scmp.eq.s32.totalorder %s30, 0
      %p162 = por %p160, %p161
      %s164 = sadd.s32 %s163, 1
      %p167 = scmp.eq.s32.totalorder %s24, 3
      %p168 = scmp.ne.s32.totalorder %s163, %s165
      %p169 = scmp.eq.s32.totalorder %s24, 0
      %p170 = por %p168, %p169
      %p171 = scmp.ne.s32.totalorder %s163, %s165
      %p172 = scmp.eq.s32.totalorder %s29, 3
      %p173 = por %p171, %p172
      %p174 = scmp.ne.s32.totalorder %s165, %s166
      %p175 = scmp.eq.s32.totalorder %s29, 0
      %p176 = por %p174, %p175
      %p177 = scmp.ne.s32.totalorder %s165, %s166
      %p178 = scmp.eq.s32.totalorder %s30, 3
      %p179 = por %p177, %p178
      %p181 = scmp.ne.s32.totalorder %s166, %s180
      %p182 = scmp.eq.s32.totalorder %s30, 0
      %p183 = por %p181, %p182
      %s185 = sadd.s32 %s184, 1
      %p188 = scmp.eq.s32.totalorder %s24, 3
      %p189 = scmp.ne.s32.totalorder %s184, %s186
      %p190 = scmp.eq.s32.totalorder %s24, 0
      %p191 = por %p189, %p190
      %p192 = scmp.ne.s32.totalorder %s184, %s186
      %p193 = scmp.eq.s32.totalorder %s29, 3
      %p194 = por %p192, %p193
      %p195 = scmp.ne.s32.totalorder %s186, %s187
      %p196 = scmp.eq.s32.totalorder %s29, 0
      %p197 = por %p195, %p196
      %p198 = scmp.ne.s32.totalorder %s186, %s187
      %p199 = scmp.eq.s32.totalorder %s30, 3
      %p200 = por %p198, %p199
      %p202 = scmp.ne.s32.totalorder %s187, %s201
      %p203 = scmp.eq.s32.totalorder %s30, 0
      %p204 = por %p202, %p203
      %s206 = sadd.s32 %s205, 1
      %p209 = scmp.eq.s32.totalorder %s24, 3
      %p210 = scmp.ne.s32.totalorder %s205, %s207
      %p211 = scmp.eq.s32.totalorder %s24, 0
      %p212 = por %p210, %p211
      %p213 = scmp.ne.s32.totalorder %s205, %s207
      %p214 = scmp.eq.s32.totalorder %s29, 3
      %p215 = por %p213, %p214
      %p216 = scmp.ne.s32.totalorder %s207, %s208
      %p217 = scmp.eq.s32.totalorder %s29, 0
      %p218 = por %p216, %p217
      %p219 = scmp.ne.s32.totalorder %s207, %s208
      %p220 = scmp.eq.s32.totalorder %s30, 3
      %p221 = por %p219, %p220
      %p223 = scmp.ne.s32.totalorder %s208, %s222
      %p224 = scmp.eq.s32.totalorder %s30, 0
      %p225 = por %p223, %p224
      %s227 = sadd.s32 %s226, 1
      %p230 = scmp.eq.s32.totalorder %s24, 3
      %p231 = scmp.ne.s32.totalorder %s226, %s228
      %p232 = scmp.eq.s32.totalorder %s24, 0
      %p233 = por %p231, %p232
      %p234 = scmp.ne.s32.totalorder %s226, %s228
      %p235 = scmp.eq.s32.totalorder %s29, 3
      %p236 = por %p234, %p235
      %p237 = scmp.ne.s32.totalorder %s228, %s229
      %p238 = scmp.eq.s32.totalorder %s29, 0
      %p239 = por %p237, %p238
      %p240 = scmp.ne.s32.totalorder %s228, %s229
      %p241 = scmp.eq.s32.totalorder %s30, 3
      %p242 = por %p240, %p241
      %p244 = scmp.ne.s32.totalorder %s229, %s243
      %p245 = scmp.eq.s32.totalorder %s30, 0
      %p246 = por %p244, %p245
      %s248 = sadd.s32 %s247, 1
      %p251 = scmp.eq.s32.totalorder %s24, 3
      %p252 = scmp.ne.s32.totalorder %s247, %s249
      %p253 = scmp.eq.s32.totalorder %s24, 0
      %p254 = por %p252, %p253
      %p255 = scmp.ne.s32.totalorder %s247, %s249
      %p256 = scmp.eq.s32.totalorder %s29, 3
      %p257 = por %p255, %p256
      %p258 = scmp.ne.s32.totalorder %s249, %s250
      %p259 = scmp.eq.s32.totalorder %s29, 0
      %p260 = por %p258, %p259
      %p261 = scmp.ne.s32.totalorder %s249, %s250
      %p262 = scmp.eq.s32.totalorder %s30, 3
      %p263 = por %p261, %p262
      %p265 = scmp.ne.s32.totalorder %s250, %s264
      %p266 = scmp.eq.s32.totalorder %s30, 0
      %p267 = por %p265, %p266
      %s269 = sadd.s32 %s268, 1
      %p272 = scmp.eq.s32.totalorder %s24, 3
      %p273 = scmp.ne.s32.totalorder %s268, %s270
      %p274 = scmp.eq.s32.totalorder %s24, 0
      %p275 = por %p273, %p274
      %p276 = scmp.ne.s32.totalorder %s268, %s270
      %p277 = scmp.eq.s32.totalorder %s29, 3
      %p278 = por %p276, %p277
      %p279 = scmp.ne.s32.totalorder %s270, %s271
      %p280 = scmp.eq.s32.totalorder %s29, 0
      %p281 = por %p279, %p280
      %p282 = scmp.ne.s32.totalorder %s270, %s271
      %p283 = scmp.eq.s32.totalorder %s30, 3
      %p284 = por %p282, %p283
      %p286 = scmp.ne.s32.totalorder %s271, %s285
      %p287 = scmp.eq.s32.totalorder %s30, 0
      %p288 = por %p286, %p287
      %s290 = sadd.s32 %s289, 1
      %p293 = scmp.eq.s32.totalorder %s24, 3
      %p294 = scmp.ne.s32.totalorder %s289, %s291
      %p295 = scmp.eq.s32.totalorder %s24, 0
      %p296 = por %p294, %p295
      %p297 = scmp.ne.s32.totalorder %s289, %s291
      %p298 = scmp.eq.s32.totalorder %s29, 3
      %p299 = por %p297, %p298
      %p300 = scmp.ne.s32.totalorder %s291, %s292
      %p301 = scmp.eq.s32.totalorder %s29, 0
      %p302 = por %p300, %p301
      %p303 = scmp.ne.s32.totalorder %s291, %s292
      %p304 = scmp.eq.s32.totalorder %s30, 3
      %p305 = por %p303, %p304
      %p307 = scmp.ne.s32.totalorder %s292, %s306
      %p308 = scmp.eq.s32.totalorder %s30, 0
      %p309 = por %p307, %p308
      %s311 = sadd.s32 %s310, 1
      %p314 = scmp.eq.s32.totalorder %s24, 3
      %p315 = scmp.ne.s32.totalorder %s310, %s312
      %p316 = scmp.eq.s32.totalorder %s24, 0
      %p317 = por %p315, %p316
      %p318 = scmp.ne.s32.totalorder %s310, %s312
      %p319 = scmp.eq.s32.totalorder %s29, 3
      %p320 = por %p318, %p319
      %p321 = scmp.ne.s32.totalorder %s312, %s313
      %p322 = scmp.eq.s32.totalorder %s29, 0
      %p323 = por %p321, %p322
      %p324 = scmp.ne.s32.totalorder %s312, %s313
      %p325 = scmp.eq.s32.totalorder %s30, 3
      %p326 = por %p324, %p325
      %p328 = scmp.ne.s32.totalorder %s313, %s327
      %p329 = scmp.eq.s32.totalorder %s30, 0
      %p330 = por %p328, %p329
      %s332 = sadd.s32 %s331, 1
      %p335 = scmp.eq.s32.totalorder %s24, 3
      %p336 = scmp.ne.s32.totalorder %s331, %s333
      %p337 = scmp.eq.s32.totalorder %s24, 0
      %p338 = por %p336, %p337
      %p339 = scmp.ne.s32.totalorder %s331, %s333
      %p340 = scmp.eq.s32.totalorder %s29, 3
      %p341 = por %p339, %p340
      %p342 = scmp.ne.s32.totalorder %s333, %s334
      %p343 = scmp.eq.s32.totalorder %s29, 0
      %p344 = por %p342, %p343
      %p345 = scmp.ne.s32.totalorder %s333, %s334
      %p346 = scmp.eq.s32.totalorder %s30, 3
      %p347 = por %p345, %p346
      %p349 = scmp.ne.s32.totalorder %s334, %s348
      %p350 = scmp.eq.s32.totalorder %s30, 0
      %p351 = por %p349, %p350
      %s353 = sadd.s32 %s352, 1
      %p356 = scmp.eq.s32.totalorder %s24, 3
      %p357 = scmp.ne.s32.totalorder %s352, %s354
      %p358 = scmp.eq.s32.totalorder %s24, 0
      %p359 = por %p357, %p358
      %p360 = scmp.ne.s32.totalorder %s352, %s354
      %p361 = scmp.eq.s32.totalorder %s29, 3
      %p362 = por %p360, %p361
      %p363 = scmp.ne.s32.totalorder %s354, %s355
      %p364 = scmp.eq.s32.totalorder %s29, 0
      %p365 = por %p363, %p364
      %p366 = scmp.ne.s32.totalorder %s354, %s355
      %p367 = scmp.eq.s32.totalorder %s30, 3
      %p368 = por %p366, %p367
      %p370 = scmp.ne.s32.totalorder %s355, %s369
      %p371 = scmp.eq.s32.totalorder %s30, 0
      %p372 = por %p370, %p371
      %s373 = ssub.s32 %s31, %s43
      %p374 = scmp.eq.s32.totalorder %s373, 0
      %s376 = sadd.s32 %s375, 1
      %s377 = scalar_select %p374, %s375, %s376
      %p380 = pneg %p374
      %p381 = scmp.eq.s32.totalorder %s24, 3
      %p382 = por %p380, %p381
      %p383 = scmp.ne.s32.totalorder %s375, %s378
      %p384 = scmp.eq.s32.totalorder %s24, 0
      %p385 = por %p383, %p384
      %p386 = scmp.ne.s32.totalorder %s375, %s378
      %p387 = scmp.eq.s32.totalorder %s29, 3
      %p388 = por %p386, %p387
      %p389 = scmp.ne.s32.totalorder %s378, %s379
      %p390 = scmp.eq.s32.totalorder %s29, 0
      %p391 = por %p389, %p390
      %p392 = scmp.ne.s32.totalorder %s378, %s379
      %p393 = scmp.eq.s32.totalorder %s30, 3
      %p394 = por %p392, %p393
      %p396 = scmp.ne.s32.totalorder %s379, %s395
      %p397 = scmp.eq.s32.totalorder %s30, 0
      %p398 = por %p396, %p397
      %p399 = scmp.le.s32.totalorder 1, %s24
      %p400 = scmp.lt.s32.totalorder %s24, 5
      %p401 = pnand %p399, %p400
      %p402 = pneg %p401
      // Predicated region
      $region9: #{tpu_custom_call.1} parent=5 // pred_check
        _
      $region10: #{tpu_custom_call.1} parent=5 // pred_check_branch
        %404 = sbr.rel (%p401) target = $region12
      $region11: #{tpu_custom_call.1} parent=5 // pred_region
        %s405 = ssub.s32 %s24, 1
        // Predicated region
        $region13: #{tpu_custom_call.1} parent=11 // pred_check
          %p406 = pneg %p92
        $region14: #{tpu_custom_call.1} parent=11 // pred_check_branch
          %408 = sbr.rel (%p406) target = $region16
        $region15: #{tpu_custom_call.1} parent=11 // pred_region
          %s409 = smul.u32 2, %s33
          %p410 = scmp.lt.s32.totalorder %s409, 1
          %s411 = scalar_select %p410, %s409, 1
          %s412 = smul.addr %s411, 2
          %s413 = smul.addr %s412, 8
          %s414 = scalar_lea.vmem %s1, %s413
          %s415 = smul.u32 2, %s33
        $region16: #{tpu_custom_call.1} parent=11 // pred_fallthru
          _
        // Predicated region
        $region17: #{tpu_custom_call.1} parent=11 // pred_check
          %p416 = pneg %p113
        $region18: #{tpu_custom_call.1} parent=11 // pred_check_branch
          %418 = sbr.rel (%p416) target = $region20
        $region19: #{tpu_custom_call.1} parent=11 // pred_region
          _
        $region20: #{tpu_custom_call.1} parent=11 // pred_fallthru
          _
        // Predicated region
        $region21: #{tpu_custom_call.1} parent=11 // pred_check
          %p419 = pneg %p134
        $region22: #{tpu_custom_call.1} parent=11 // pred_check_branch
          %421 = sbr.rel (%p419) target = $region24
        $region23: #{tpu_custom_call.1} parent=11 // pred_region
          _
        $region24: #{tpu_custom_call.1} parent=11 // pred_fallthru
          _
        // Predicated region
        $region25: #{tpu_custom_call.1} parent=11 // pred_check
          %p422 = pneg %p155
        $region26: #{tpu_custom_call.1} parent=11 // pred_check_branch
          %424 = sbr.rel (%p422) target = $region28
        $region27: #{tpu_custom_call.1} parent=11 // pred_region
          _
        $region28: #{tpu_custom_call.1} parent=11 // pred_fallthru
          _
        // Predicated region
        $region29: #{tpu_custom_call.1} parent=11 // pred_check
          %p425 = pneg %p176
        $region30: #{tpu_custom_call.1} parent=11 // pred_check_branch
          %427 = sbr.rel (%p425) target = $region32
        $region31: #{tpu_custom_call.1} parent=11 // pred_region
          %s429 = ssub.s32 16, 16
          %430 = vsyncadd [#allocation6], %s429
          %s432 = sshll.u32 [#allocation5], 4
          %s433 = int_to_ptr.vmem [resolvable:$true] %s432
          %435 = dma.hbm_to_vmem [thread:$0]  %s5, 16, %s433, [#allocation6]
        $region32: #{tpu_custom_call.1} parent=11 // pred_fallthru
          _
        // Predicated region
        $region33: #{tpu_custom_call.1} parent=11 // pred_check
          %p436 = pneg %p197
        $region34: #{tpu_custom_call.1} parent=11 // pred_check_branch
          %438 = sbr.rel (%p436) target = $region36
        $region35: #{tpu_custom_call.1} parent=11 // pred_region
          _
        $region36: #{tpu_custom_call.1} parent=11 // pred_fallthru
          _
        // Predicated region
        $region37: #{tpu_custom_call.1} parent=11 // pred_check
          %p439 = pneg %p218
        $region38: #{tpu_custom_call.1} parent=11 // pred_check_branch
          %441 = sbr.rel (%p439) target = $region40
        $region39: #{tpu_custom_call.1} parent=11 // pred_region
          %s443 = ssub.s32 16, 16
          %444 = vsyncadd [#allocation9], %s443
          %s446 = sshll.u32 [#allocation8], 4
          %s447 = int_to_ptr.vmem [resolvable:$true] %s446
          %449 = dma.hbm_to_vmem [thread:$0]  %s7, 16, %s447, [#allocation9]
        $region40: #{tpu_custom_call.1} parent=11 // pred_fallthru
          _
        // Predicated region
        $region41: #{tpu_custom_call.1} parent=11 // pred_check
          %p450 = pneg %p239
        $region42: #{tpu_custom_call.1} parent=11 // pred_check_branch
          %452 = sbr.rel (%p450) target = $region44
        $region43: #{tpu_custom_call.1} parent=11 // pred_region
          %s454 = ssub.s32 16, 16
          %455 = vsyncadd [#allocation9], %s454
          %s457 = sshll.u32 [#allocation10], 4
          %s458 = int_to_ptr.vmem [resolvable:$true] %s457
          %460 = dma.hbm_to_vmem [thread:$0]  %s8, 16, %s458, [#allocation9]
        $region44: #{tpu_custom_call.1} parent=11 // pred_fallthru
          _
        // Predicated region
        $region45: #{tpu_custom_call.1} parent=11 // pred_check
          %p461 = pneg %p260
        $region46: #{tpu_custom_call.1} parent=11 // pred_check_branch
          %463 = sbr.rel (%p461) target = $region48
        $region47: #{tpu_custom_call.1} parent=11 // pred_region
          _
        $region48: #{tpu_custom_call.1} parent=11 // pred_fallthru
          _
        // Predicated region
        $region49: #{tpu_custom_call.1} parent=11 // pred_check
          %p464 = pneg %p281
        $region50: #{tpu_custom_call.1} parent=11 // pred_check_branch
          %466 = sbr.rel (%p464) target = $region52
        $region51: #{tpu_custom_call.1} parent=11 // pred_region
          _
        $region52: #{tpu_custom_call.1} parent=11 // pred_fallthru
          _
        // Predicated region
        $region53: #{tpu_custom_call.1} parent=11 // pred_check
          %p467 = pneg %p302
        $region54: #{tpu_custom_call.1} parent=11 // pred_check_branch
          %469 = sbr.rel (%p467) target = $region56
        $region55: #{tpu_custom_call.1} parent=11 // pred_region
          _
        $region56: #{tpu_custom_call.1} parent=11 // pred_fallthru
          _
        // Predicated region
        $region57: #{tpu_custom_call.1} parent=11 // pred_check
          %p470 = pneg %p323
        $region58: #{tpu_custom_call.1} parent=11 // pred_check_branch
          %472 = sbr.rel (%p470) target = $region60
        $region59: #{tpu_custom_call.1} parent=11 // pred_region
          _
        $region60: #{tpu_custom_call.1} parent=11 // pred_fallthru
          _
        // Predicated region
        $region61: #{tpu_custom_call.1} parent=11 // pred_check
          %p473 = pneg %p344
        $region62: #{tpu_custom_call.1} parent=11 // pred_check_branch
          %475 = sbr.rel (%p473) target = $region64
        $region63: #{tpu_custom_call.1} parent=11 // pred_region
          _
        $region64: #{tpu_custom_call.1} parent=11 // pred_fallthru
          _
        // Predicated region
        $region65: #{tpu_custom_call.1} parent=11 // pred_check
          %p476 = pneg %p365
        $region66: #{tpu_custom_call.1} parent=11 // pred_check_branch
          %478 = sbr.rel (%p476) target = $region68
        $region67: #{tpu_custom_call.1} parent=11 // pred_region
          _
        $region68: #{tpu_custom_call.1} parent=11 // pred_fallthru
          _
      $region12: #{tpu_custom_call.1} parent=5 // pred_fallthru
        _
      %p479 = scmp.lt.s32.totalorder %s24, 4
      // Predicated region
      $region69: #{tpu_custom_call.1} parent=5 // pred_check
        %p480 = pneg %p479
      $region70: #{tpu_custom_call.1} parent=5 // pred_check_branch
        %482 = sbr.rel (%p480) target = $region72
      $region71: #{tpu_custom_call.1} parent=5 // pred_region
        // Predicated region
        $region73: #{tpu_custom_call.1} parent=71 // pred_check
          %p483 = pneg %p60
        $region74: #{tpu_custom_call.1} parent=71 // pred_check_branch
          %485 = sbr.rel (%p483) target = $region76
        $region75: #{tpu_custom_call.1} parent=71 // pred_region
          %s486 = sand.u32 %s50, 1
          %s487 = sand.u32 %s50, 1
          %s488 = smul.addr %s487, 16
          %s489 = scalar_lea.vmem [#allocation4], %s488
          %s490 = ssub.s32 3, %s32
          %s491 = smul.u32 2, %s31
          %s492 = smul.u32 2, %s490
          %s493 = smul.addr %s491, 8
          %s494 = sadd.s32 %s492, %s493
          %s495 = smul.addr %s494, 4
          %s496 = scalar_lea.vmem %s0, %s495
          // Predicated region
          $region77: #{tpu_custom_call.1} parent=75 // pred_check
            _
          $region78: #{tpu_custom_call.1} parent=75 // pred_check_branch
            %498 = sbr.rel (0) target = $region80
          $region79: #{tpu_custom_call.1} parent=75 // pred_region
            // Predicated region
            $region81: #{tpu_custom_call.1} parent=79 // pred_check
              _
            $region82: #{tpu_custom_call.1} parent=79 // pred_check_branch
              %500 = sbr.rel target = $region84
            $region83: #{tpu_custom_call.1} parent=79 // pred_region
              // Predicated region
              $region96: #{tpu_custom_call.1} parent=83 // pred_check
                _
              $region97: #{tpu_custom_call.1} parent=83 // pred_check_branch
                %521 = sbr.rel (0) target = $region99
              $region98: #{tpu_custom_call.1} parent=83 // pred_region
                loop: start=0, step=1, limit=1
                $region100: #{tpu_custom_call.1} parent=98 // loop_pre_header
                  _
                $region101: #{tpu_custom_call.1} parent=98 // loop_header
                  %s523 = sphi 0, %s527
                  %p524 = scmp.ge.s32.totalorder %s523, 1
                  %s528 = sphi %s496, %s496
                  %s529 = sphi %s489, %s489
                $region102: #{tpu_custom_call.1} parent=98 // loop_header_branch
                  %526 = sbr.rel (%p524) target = $region106
                $region103: #{tpu_custom_call.1} parent=98 // loop_body
                  _
                $region104: #{tpu_custom_call.1} parent=98 // loop_footer
                  %s527 = sadd.s32 1, %s523
                $region105: #{tpu_custom_call.1} parent=98 // loop_footer_branch
                  %522 = sbr.rel target = $region101
                $region106: #{tpu_custom_call.1} parent=98 // loop_exit
                  _
                loop: start=0, step=1, limit=1
                $region107: #{tpu_custom_call.1} parent=98 // loop_pre_header
                  _
                $region108: #{tpu_custom_call.1} parent=98 // loop_header
                  %s532 = sphi 0, %s536
                  %p533 = scmp.ge.s32.totalorder %s532, 1
                  %s537 = sphi %s496, %s496
                  %s538 = sphi %s489, %s489
                $region109: #{tpu_custom_call.1} parent=98 // loop_header_branch
                  %535 = sbr.rel (%p533) target = $region113
                $region110: #{tpu_custom_call.1} parent=98 // loop_body
                  %v539 = vld [vmem:[%s537] sm:$0xf]
                  %540 = vst [vmem:[%s538] sm:$0xf] %v539
                  %v541 = vld [vmem:[%s537 + $0x4] sm:$0xf]
                  %542 = vst [vmem:[%s538 + $0x4] sm:$0xf] %v541
                  %v543 = vld [vmem:[%s537 + $0x20] sm:$0xf]
                  %544 = vst [vmem:[%s538 + $0x8] sm:$0xf] %v543
                  %v545 = vld [vmem:[%s537 + $0x24] sm:$0xf]
                  %546 = vst [vmem:[%s538 + $0xc] sm:$0xf] %v545
                $region111: #{tpu_custom_call.1} parent=98 // loop_footer
                  %s536 = sadd.s32 1, %s532
                $region112: #{tpu_custom_call.1} parent=98 // loop_footer_branch
                  %531 = sbr.rel target = $region108
                $region113: #{tpu_custom_call.1} parent=98 // loop_exit
                  _
              $region99: #{tpu_custom_call.1} parent=83 // pred_fallthru
                _
            $region84: #{tpu_custom_call.1} parent=79 // pred_fallthru
              _
            // Predicated region
            $region85: #{tpu_custom_call.1} parent=79 // pred_check
              _
            $region86: #{tpu_custom_call.1} parent=79 // pred_check_branch
              %502 = sbr.rel (0) target = $region88
            $region87: #{tpu_custom_call.1} parent=79 // pred_region
              loop: start=0, step=1, limit=1
              $region89: #{tpu_custom_call.1} parent=87 // loop_pre_header
                _
              $region90: #{tpu_custom_call.1} parent=87 // loop_header
                %s505 = sphi 0, %s509
                %p506 = scmp.ge.s32.totalorder %s505, 1
                %s510 = sphi %s496, %s496
                %s511 = sphi %s489, %s489
              $region91: #{tpu_custom_call.1} parent=87 // loop_header_branch
                %508 = sbr.rel (%p506) target = $region95
              $region92: #{tpu_custom_call.1} parent=87 // loop_body
                %v512 = vld [vmem:[%s510] sm:$0xf]
                %513 = vst [vmem:[%s511] sm:$0xf] %v512
                %v514 = vld [vmem:[%s510 + $0x4] sm:$0xf]
                %515 = vst [vmem:[%s511 + $0x4] sm:$0xf] %v514
                %v516 = vld [vmem:[%s510 + $0x20] sm:$0xf]
                %517 = vst [vmem:[%s511 + $0x8] sm:$0xf] %v516
                %v518 = vld [vmem:[%s510 + $0x24] sm:$0xf]
                %519 = vst [vmem:[%s511 + $0xc] sm:$0xf] %v518
              $region93: #{tpu_custom_call.1} parent=87 // loop_footer
                %s509 = sadd.s32 1, %s505
              $region94: #{tpu_custom_call.1} parent=87 // loop_footer_branch
                %504 = sbr.rel target = $region90
              $region95: #{tpu_custom_call.1} parent=87 // loop_exit
                _
            $region88: #{tpu_custom_call.1} parent=79 // pred_fallthru
              _
          $region80: #{tpu_custom_call.1} parent=75 // pred_fallthru
            _
          %547 = vnop
        $region76: #{tpu_custom_call.1} parent=71 // pred_fallthru
          _
      $region72: #{tpu_custom_call.1} parent=5 // pred_fallthru
        _
      %p548 = scmp.le.s32.totalorder 1, %s24
      %p549 = scmp.lt.s32.totalorder %s24, 5
      %p550 = pnand %p548, %p549
      %p551 = pneg %p550
      // Predicated region
      $region114: #{tpu_custom_call.1} parent=5 // pred_check
        _
      $region115: #{tpu_custom_call.1} parent=5 // pred_check_branch
        %553 = sbr.rel (%p550) target = $region117
      $region116: #{tpu_custom_call.1} parent=5 // pred_region
        %s554 = ssub.s32 %s24, 1
        %s555 = sand.u32 %s53, 1
        %s556 = sand.u32 %s53, 1
        %s557 = smul.addr %s556, 16
        %s558 = scalar_lea.vmem [#allocation4], %s557
        // Predicated region
        $region118: #{tpu_custom_call.1} parent=116 // pred_check
          %p559 = pneg %p66
        $region119: #{tpu_custom_call.1} parent=116 // pred_check_branch
          %561 = sbr.rel (%p559) target = $region121
        $region120: #{tpu_custom_call.1} parent=116 // pred_region
          _
        $region121: #{tpu_custom_call.1} parent=116 // pred_fallthru
          _
        // Predicated region
        $region122: #{tpu_custom_call.1} parent=116 // pred_check
          %p562 = pneg %p176
        $region123: #{tpu_custom_call.1} parent=116 // pred_check_branch
          %564 = sbr.rel (%p562) target = $region125
        $region124: #{tpu_custom_call.1} parent=116 // pred_region
          %565 = dma.done [#allocation6], 16
        $region125: #{tpu_custom_call.1} parent=116 // pred_fallthru
          _
        // Predicated region
        $region126: #{tpu_custom_call.1} parent=116 // pred_check
          %p566 = pneg %p218
        $region127: #{tpu_custom_call.1} parent=116 // pred_check_branch
          %568 = sbr.rel (%p566) target = $region129
        $region128: #{tpu_custom_call.1} parent=116 // pred_region
          %569 = dma.done [#allocation9], 16
        $region129: #{tpu_custom_call.1} parent=116 // pred_fallthru
          _
        // Predicated region
        $region130: #{tpu_custom_call.1} parent=116 // pred_check
          %p570 = pneg %p239
        $region131: #{tpu_custom_call.1} parent=116 // pred_check_branch
          %572 = sbr.rel (%p570) target = $region133
        $region132: #{tpu_custom_call.1} parent=116 // pred_region
          %573 = dma.done [#allocation9], 16
        $region133: #{tpu_custom_call.1} parent=116 // pred_fallthru
          _
        %s574 = sand.u32 %s53, 1
        %s575 = sand.u32 %s53, 1
        %s576 = smul.addr %s575, 16
        %s577 = scalar_lea.vmem [#allocation4], %s576
        %p578 = pneg %p66
        %p579 = pneg %p63
        %s580 = smul.u32 2, %s33
        %p581 = scmp.lt.s32.totalorder %s580, 1
        %s582 = scalar_select %p581, %s580, 1
        %s583 = smul.addr %s582, 2
        %s584 = smul.addr %s583, 8
        %s585 = scalar_lea.vmem %s1, %s584
        %p586 = pneg %p92
        %p587 = pneg %p89
        %p588 = pneg %p113
        %p589 = pneg %p110
        %p590 = pneg %p134
        %p591 = pneg %p131
        %p592 = pneg %p155
        %p593 = pneg %p152
        %p594 = pneg %p176
        %p595 = pneg %p173
        %p596 = pneg %p197
        %p597 = pneg %p194
        %p598 = pneg %p218
        %p599 = pneg %p215
        %p600 = pneg %p239
        %p601 = pneg %p236
        %p602 = pneg %p260
        %p603 = pneg %p257
        %p604 = pneg %p281
        %p605 = pneg %p278
        %p606 = pneg %p302
        %p607 = pneg %p299
        %p608 = pneg %p323
        %p609 = pneg %p320
        %p610 = pneg %p344
        %p611 = pneg %p341
        %p612 = pneg %p365
        %p613 = pneg %p362
        %p614 = pneg %p391
        %p615 = pneg %p388
        %s616 = ssub.s32 3, %s34
        %s617 = smul.u32 2, %s33
        %s618 = smul.u32 2, %s616
        %s619 = smul.u32 2, %s33
        %p620 = scmp.lt.s32.totalorder %s619, 1
        %s621 = scalar_select %p620, %s619, 1
        %s622 = smul.addr %s621, 2
        %s623 = smul.addr %s622, 8
        %s624 = scalar_lea.vmem %s1, %s623
        %s625 = smul.u32 2, %s33
        %s626 = smul.u32 4, %s33
        %v628 = vld [vmem:[%s558] sm:$0xf]
        %v629 = vld [vmem:[%s558 + $0x4] sm:$0xf]
        %v630 = vunpack.c.l.bf16 %v628
        %v631 = vunpack.c.l.bf16 %v629
        %v632 = vld [vmem:[%s624] sm:$0xff]
        %v633 = vld [vmem:[%s624 + $0x8] sm:$0xff]
        %vm634 = vcmask 130048
        %v636 = vsel %vm634, %v630, 0
        %v639 = vsel %vm634, %v631, 0
        %641 = vmatprep.subr.mxu0 0.0
        %642 = vmatpush1.msra.mxu0 %v632
        %643 = vmatprep.subr.mxu0 0.0
        %644 = vmatpush1.msra.mxu0 %v633
        %645 = vmatprep.subr.mxu0 0.0
        %646 = vmatpush1.msra.mxu0 0.0
        %647 = vmatprep.subr.mxu0 0.0
        %648 = vmatpush1.msra.mxu0 0.0
        %649 = vmatprep.subr.mxu0 0.0
        %650 = vmatpush1.msra.mxu0 0.0
        %651 = vmatprep.subr.mxu0 0.0
        %652 = vmatpush1.msra.mxu0 0.0
        %653 = vmatprep.subr.mxu0 0.0
        %654 = vmatpush1.msra.mxu0 0.0
        %655 = vmatprep.subr.mxu0 0.0
        %656 = vmatpush1.msra.mxu0 0.0
        %657 = vmatprep.subr.mxu0 0.0
        %658 = vmatpush1.msra.mxu0 0.0
        %659 = vmatprep.subr.mxu0 0.0
        %660 = vmatpush1.msra.mxu0 0.0
        %661 = vmatprep.subr.mxu0 0.0
        %662 = vmatpush1.msra.mxu0 0.0
        %663 = vmatprep.subr.mxu0 0.0
        %664 = vmatpush1.msra.mxu0 0.0
        %665 = vmatprep.subr.mxu0 0.0
        %666 = vmatpush1.msra.mxu0 0.0
        %667 = vmatprep.subr.mxu0 0.0
        %668 = vmatpush1.msra.mxu0 0.0
        %669 = vmatprep.subr.mxu0 0.0
        %670 = vmatpush1.msra.mxu0 0.0
        %671 = vmatprep.subr.mxu0 0.0
        %672 = vmatpush1.msra.mxu0 0.0
        %673 = vmatprep.subr.mxu0 0.0
        %674 = vmatpush1.msra.mxu0 0.0
        %675 = vmatprep.subr.mxu0 0.0
        %676 = vmatpush1.msra.mxu0 0.0
        %677 = vmatprep.subr.mxu0 0.0
        %678 = vmatpush1.msra.mxu0 0.0
        %679 = vmatprep.subr.mxu0 0.0
        %680 = vmatpush1.msra.mxu0 0.0
        %681 = vmatprep.subr.mxu0 0.0
        %682 = vmatpush1.msra.mxu0 0.0
        %683 = vmatprep.subr.mxu0 0.0
        %684 = vmatpush1.msra.mxu0 0.0
        %685 = vmatprep.subr.mxu0 0.0
        %686 = vmatpush1.msra.mxu0 0.0
        %687 = vmatprep.subr.mxu0 0.0
        %688 = vmatpush1.msra.mxu0 0.0
        %689 = vmatprep.subr.mxu0 0.0
        %690 = vmatpush1.msra.mxu0 0.0
        %691 = vmatprep.subr.mxu0 0.0
        %692 = vmatpush1.msra.mxu0 0.0
        %693 = vmatprep.subr.mxu0 0.0
        %694 = vmatpush1.msra.mxu0 0.0
        %695 = vmatprep.subr.mxu0 0.0
        %696 = vmatpush1.msra.mxu0 0.0
        %697 = vmatprep.subr.mxu0 0.0
        %698 = vmatpush1.msra.mxu0 0.0
        %699 = vmatprep.subr.mxu0 0.0
        %700 = vmatpush1.msra.mxu0 0.0
        %701 = vmatprep.subr.mxu0 0.0
        %702 = vmatpush1.msra.mxu0 0.0
        %703 = vmatprep.subr.mxu0 0.0
        %704 = vmatpush1.msra.mxu0 0.0
        %705 = vmatprep.mubr.f32.mxu0 0.0
        %706 = vmatmul.mubr.f32.gmra.mrb[0].mxu0 %v636
        %v707 = vpop.f32.mrb[0].mxu0
        %v708 = vadd.f32 0.0, %v707
        %v709 = vpop.f32.mrb[0].mxu0
        %710 = vmatprep.mubr.f32.mxu0 0.0
        %711 = vmatmul.mubr.f32.gmra.mrb[0].mxu0 %v639
        %v712 = vpop.f32.mrb[0].mxu0
        %v713 = vadd.f32 0.0, %v712
        %v714 = vpop.f32.mrb[0].mxu0
        %715 = vdwg.mxu0
        %s716 = scalar_lea.vmem %s558, 8 [#allocation4]
        %v717 = vld [vmem:[%s716] sm:$0xf]
        %v718 = vld [vmem:[%s716 + $0x4] sm:$0xf]
        %v719 = vunpack.c.l.bf16 %v717
        %v720 = vunpack.c.l.bf16 %v718
        %s721 = scalar_lea.vmem %s624, 16
        %v722 = vld [vmem:[%s721] sm:$0xff]
        %v723 = vld [vmem:[%s721 + $0x8] sm:$0xff]
        %v725 = vsel %vm634, %v719, 0
        %v728 = vsel %vm634, %v720, 0
        %730 = vmatprep.subr.mxu0 0.0
        %731 = vmatpush1.msra.mxu0 %v722
        %732 = vmatprep.subr.mxu0 0.0
        %733 = vmatpush1.msra.mxu0 %v723
        %734 = vmatprep.subr.mxu0 0.0
        %735 = vmatpush1.msra.mxu0 0.0
        %736 = vmatprep.subr.mxu0 0.0
        %737 = vmatpush1.msra.mxu0 0.0
        %738 = vmatprep.subr.mxu0 0.0
        %739 = vmatpush1.msra.mxu0 0.0
        %740 = vmatprep.subr.mxu0 0.0
        %741 = vmatpush1.msra.mxu0 0.0
        %742 = vmatprep.subr.mxu0 0.0
        %743 = vmatpush1.msra.mxu0 0.0
        %744 = vmatprep.subr.mxu0 0.0
        %745 = vmatpush1.msra.mxu0 0.0
        %746 = vmatprep.subr.mxu0 0.0
        %747 = vmatpush1.msra.mxu0 0.0
        %748 = vmatprep.subr.mxu0 0.0
        %749 = vmatpush1.msra.mxu0 0.0
        %750 = vmatprep.subr.mxu0 0.0
        %751 = vmatpush1.msra.mxu0 0.0
        %752 = vmatprep.subr.mxu0 0.0
        %753 = vmatpush1.msra.mxu0 0.0
        %754 = vmatprep.subr.mxu0 0.0
        %755 = vmatpush1.msra.mxu0 0.0
        %756 = vmatprep.subr.mxu0 0.0
        %757 = vmatpush1.msra.mxu0 0.0
        %758 = vmatprep.subr.mxu0 0.0
        %759 = vmatpush1.msra.mxu0 0.0
        %760 = vmatprep.subr.mxu0 0.0
        %761 = vmatpush1.msra.mxu0 0.0
        %762 = vmatprep.subr.mxu0 0.0
        %763 = vmatpush1.msra.mxu0 0.0
        %764 = vmatprep.subr.mxu0 0.0
        %765 = vmatpush1.msra.mxu0 0.0
        %766 = vmatprep.subr.mxu0 0.0
        %767 = vmatpush1.msra.mxu0 0.0
        %768 = vmatprep.subr.mxu0 0.0
        %769 = vmatpush1.msra.mxu0 0.0
        %770 = vmatprep.subr.mxu0 0.0
        %771 = vmatpush1.msra.mxu0 0.0
        %772 = vmatprep.subr.mxu0 0.0
        %773 = vmatpush1.msra.mxu0 0.0
        %774 = vmatprep.subr.mxu0 0.0
        %775 = vmatpush1.msra.mxu0 0.0
        %776 = vmatprep.subr.mxu0 0.0
        %777 = vmatpush1.msra.mxu0 0.0
        %778 = vmatprep.subr.mxu0 0.0
        %779 = vmatpush1.msra.mxu0 0.0
        %780 = vmatprep.subr.mxu0 0.0
        %781 = vmatpush1.msra.mxu0 0.0
        %782 = vmatprep.subr.mxu0 0.0
        %783 = vmatpush1.msra.mxu0 0.0
        %784 = vmatprep.subr.mxu0 0.0
        %785 = vmatpush1.msra.mxu0 0.0
        %786 = vmatprep.subr.mxu0 0.0
        %787 = vmatpush1.msra.mxu0 0.0
        %788 = vmatprep.subr.mxu0 0.0
        %789 = vmatpush1.msra.mxu0 0.0
        %790 = vmatprep.subr.mxu0 0.0
        %791 = vmatpush1.msra.mxu0 0.0
        %792 = vmatprep.subr.mxu0 0.0
        %793 = vmatpush1.msra.mxu0 0.0
        %794 = vmatprep.mubr.f32.mxu0 0.0
        %795 = vmatmul.mubr.f32.gmra.mrb[0].mxu0 %v725
        %v796 = vpop.f32.mrb[0].mxu0
        %v797 = vadd.f32 0.0, %v796
        %v798 = vpop.f32.mrb[0].mxu0
        %799 = vmatprep.mubr.f32.mxu0 0.0
        %800 = vmatmul.mubr.f32.gmra.mrb[0].mxu0 %v728
        %v801 = vpop.f32.mrb[0].mxu0
        %v802 = vadd.f32 0.0, %v801
        %v803 = vpop.f32.mrb[0].mxu0
        %804 = vdwg.mxu0
        %p805 = scmp.eq.s32.totalorder %s34, 0
        // Predicated region
        $region134: #{tpu_custom_call.1} parent=116 // pred_check
          %p806 = pneg %p805
        $region135: #{tpu_custom_call.1} parent=116 // pred_check_branch
          %808 = sbr.rel (%p806) target = $region137
        $region136: #{tpu_custom_call.1} parent=116 // pred_region
          %vm809 = vcmask 261120
          %810 = vst.msk [vmem:[#allocation2] sm:$0xff] %vm809, 0.0
          %811 = vst.msk [vmem:[#allocation2 + $0x8] sm:$0xff] %vm809, 0.0
          %812 = vst.msk [vmem:[#allocation2 + $0x10] sm:$0xff] %vm809, 0.0
          %813 = vst.msk [vmem:[#allocation2 + $0x18] sm:$0xff] %vm809, 0.0
          %814 = vst.msk [vmem:[#allocation3] sm:$0xff] %vm809, 0.0
          %815 = vst.msk [vmem:[#allocation3 + $0x8] sm:$0xff] %vm809, 0.0
          %816 = vst.msk [vmem:[#allocation3 + $0x10] sm:$0xff] %vm809, 0.0
          %817 = vst.msk [vmem:[#allocation3 + $0x18] sm:$0xff] %vm809, 0.0
        $region137: #{tpu_custom_call.1} parent=116 // pred_fallthru
          _
        %v818 = vld [vmem:[%s2] sm:$0x1]
        %v819 = vld [vmem:[%s3] sm:$0x1]
        %vm820 = vcmask 261120
        %v821 = vsel %vm820, %v708, 0.0
        %822 = vadd.xlane.f32.xlu0 %v821
        %v823 = vpop.xlane.xlu0 %822
        %v824 = vsel %vm820, %v713, 0.0
        %825 = vadd.xlane.f32.xlu0 %v824
        %v826 = vpop.xlane.xlu0 %825
        %v827 = vsel %vm820, %v797, 0.0
        %828 = vadd.xlane.f32.xlu0 %v827
        %v829 = vpop.xlane.xlu0 %828
        %v830 = vsel %vm820, %v802, 0.0
        %831 = vadd.xlane.f32.xlu0 %v830
        %v832 = vpop.xlane.xlu0 %831
        %v833 = vrcp.pop 32.0
        %v834 = vmul.f32 %v823, %v833
        %v835 = vmul.f32 %v826, %v833
        %v836 = vmul.f32 %v829, %v833
        %v837 = vmul.f32 %v832, %v833
        %v838 = vsub.f32 %v708, %v834
        %v839 = vsub.f32 %v713, %v835
        %v840 = vsub.f32 %v797, %v836
        %v841 = vsub.f32 %v802, %v837
        %v842 = vmul.f32 %v838, %v838
        %v843 = vmul.f32 %v839, %v839
        %v844 = vmul.f32 %v840, %v840
        %v845 = vmul.f32 %v841, %v841
        %v846 = vsel %vm820, %v842, 0.0
        %847 = vadd.xlane.f32.xlu0 %v846
        %v848 = vpop.xlane.xlu0 %847
        %v849 = vsel %vm820, %v843, 0.0
        %850 = vadd.xlane.f32.xlu0 %v849
        %v851 = vpop.xlane.xlu0 %850
        %v852 = vsel %vm820, %v844, 0.0
        %853 = vadd.xlane.f32.xlu0 %v852
        %v854 = vpop.xlane.xlu0 %853
        %v855 = vsel %vm820, %v845, 0.0
        %856 = vadd.xlane.f32.xlu0 %v855
        %v857 = vpop.xlane.xlu0 %856
        %v858 = vmul.f32 %v848, %v833
        %v859 = vmul.f32 %v851, %v833
        %v860 = vmul.f32 %v854, %v833
        %v861 = vmul.f32 %v857, %v833
        %v862 = vadd.f32 %v858, 1e-05
        %v863 = vadd.f32 %v859, 1e-05
        %v864 = vadd.f32 %v860, 1e-05
        %v865 = vadd.f32 %v861, 1e-05
        %v866 = vrsqrt.pop %v862
        %v867 = vrsqrt.pop %v863
        %v868 = vrsqrt.pop %v864
        %v869 = vrsqrt.pop %v865
        %v870 = vmul.f32 %v838, %v866
        %v871 = vmul.f32 %v839, %v867
        %v872 = vmul.f32 %v840, %v868
        %v873 = vmul.f32 %v841, %v869
        %v875 = vlaneseq
        %v876 = vshrl.u32 %v875, 7
        %v877 = vsub.s32 0, %v876
        %v878 = vrot.slane %v818, %v877
        %v880 = vmul.f32 %v870, %v878
        %v881 = vmul.f32 %v871, %v878
        %v882 = vmul.f32 %v872, %v878
        %v883 = vmul.f32 %v873, %v878
        %v885 = vlaneseq
        %v886 = vshrl.u32 %v885, 7
        %v887 = vsub.s32 0, %v886
        %v888 = vrot.slane %v819, %v887
        %v890 = vadd.f32 %v880, %v888
        %v891 = vadd.f32 %v881, %v888
        %v892 = vadd.f32 %v882, %v888
        %v893 = vadd.f32 %v883, %v888
        %v894 = vpack.c.bf16 %v891, %v890
        %v895 = vpack.c.bf16 %v893, %v892
        %v896 = vld [vmem:[%s4] sm:$0xf]
        %v897 = vld [vmem:[%s4 + $0x4] sm:$0xf]
        %v898 = vld [vmem:[%s4 + $0x8] sm:$0xf]
        %v899 = vld [vmem:[%s4 + $0xc] sm:$0xf]
        %v900 = vld [vmem:[#allocation2] sm:$0xff]
        %v901 = vld [vmem:[#allocation2 + $0x8] sm:$0xff]
        %v902 = vld [vmem:[#allocation2 + $0x10] sm:$0xff]
        %v903 = vld [vmem:[#allocation2 + $0x18] sm:$0xff]
        %v904 = vpack.c.bf16 %v901, %v900
        %v905 = vpack.c.bf16 %v903, %v902
        %v906 = vld [vmem:[%s6] sm:$0xf]
        %v907 = vld [vmem:[%s6 + $0x4] sm:$0xf]
        %v908 = vld [vmem:[%s6 + $0x8] sm:$0xf]
        %v909 = vld [vmem:[%s6 + $0xc] sm:$0xf]
        %v914 = vunpack.c.l.b16 %v906
        %v915 = vunpack.c.l.b16 %v907
        %v916 = vunpack.c.l.b16 %v908
        %v917 = vunpack.c.l.b16 %v909
        %v918 = vpack.c.b16 %v915, %v914
        %v919 = vpack.c.b16 %v917, %v916
        %v923 = vsel %vm820, %v904, 0
        %v926 = vsel %vm820, %v905, 0
        %928 = vmatprep.subr.bf16.mxu0 0
        %929 = vmatpush1.bf16.msra.mxu0 %v918
        %930 = vmatprep.subr.bf16.mxu0 0
        %931 = vmatpush1.bf16.msra.mxu0 %v919
        %932 = vmatprep.subr.bf16.mxu0 0
        %933 = vmatpush1.bf16.msra.mxu0 0
        %934 = vmatprep.subr.bf16.mxu0 0
        %935 = vmatpush1.bf16.msra.mxu0 0
        %936 = vmatprep.subr.bf16.mxu0 0
        %937 = vmatpush1.bf16.msra.mxu0 0
        %938 = vmatprep.subr.bf16.mxu0 0
        %939 = vmatpush1.bf16.msra.mxu0 0
        %940 = vmatprep.subr.bf16.mxu0 0
        %941 = vmatpush1.bf16.msra.mxu0 0
        %942 = vmatprep.subr.bf16.mxu0 0
        %943 = vmatpush1.bf16.msra.mxu0 0
        %944 = vmatprep.subr.bf16.mxu0 0
        %945 = vmatpush1.bf16.msra.mxu0 0
        %946 = vmatprep.subr.bf16.mxu0 0
        %947 = vmatpush1.bf16.msra.mxu0 0
        %948 = vmatprep.subr.bf16.mxu0 0
        %949 = vmatpush1.bf16.msra.mxu0 0
        %950 = vmatprep.subr.bf16.mxu0 0
        %951 = vmatpush1.bf16.msra.mxu0 0
        %952 = vmatprep.subr.bf16.mxu0 0
        %953 = vmatpush1.bf16.msra.mxu0 0
        %954 = vmatprep.subr.bf16.mxu0 0
        %955 = vmatpush1.bf16.msra.mxu0 0
        %956 = vmatprep.subr.bf16.mxu0 0
        %957 = vmatpush1.bf16.msra.mxu0 0
        %958 = vmatprep.subr.bf16.mxu0 0
        %959 = vmatpush1.bf16.msra.mxu0 0
        %960 = vmatprep.mubr.bf16.mxu0 0
        %961 = vmatmul.mubr.bf16.gmra.mrb[0].mxu0 %v923
        %v962 = vpop.f32.mrb[0].mxu0
        %v963 = vadd.f32 0.0, %v962
        %v964 = vpop.f32.mrb[0].mxu0
        %v965 = vpop.f32.mrb[0].mxu0
        %v966 = vadd.f32 0.0, %v965
        %v967 = vpop.f32.mrb[0].mxu0
        %968 = vmatprep.mubr.bf16.mxu0 0
        %969 = vmatmul.mubr.bf16.gmra.mrb[0].mxu0 %v926
        %v970 = vpop.f32.mrb[0].mxu0
        %v971 = vadd.f32 0.0, %v970
        %v972 = vpop.f32.mrb[0].mxu0
        %v973 = vpop.f32.mrb[0].mxu0
        %v974 = vadd.f32 0.0, %v973
        %v975 = vpop.f32.mrb[0].mxu0
        %976 = vdwg.mxu0
        %v981 = vunpack.c.l.b16 %v896
        %v982 = vunpack.c.l.b16 %v897
        %v983 = vunpack.c.l.b16 %v898
        %v984 = vunpack.c.l.b16 %v899
        %v985 = vpack.c.b16 %v982, %v981
        %v986 = vpack.c.b16 %v984, %v983
        %v990 = vsel %vm820, %v894, 0
        %v993 = vsel %vm820, %v895, 0
        %995 = vmatprep.subr.bf16.mxu0 0
        %996 = vmatpush1.bf16.msra.mxu0 %v985
        %997 = vmatprep.subr.bf16.mxu0 0
        %998 = vmatpush1.bf16.msra.mxu0 %v986
        %999 = vmatprep.subr.bf16.mxu0 0
        %1000 = vmatpush1.bf16.msra.mxu0 0
        %1001 = vmatprep.subr.bf16.mxu0 0
        %1002 = vmatpush1.bf16.msra.mxu0 0
        %1003 = vmatprep.subr.bf16.mxu0 0
        %1004 = vmatpush1.bf16.msra.mxu0 0
        %1005 = vmatprep.subr.bf16.mxu0 0
        %1006 = vmatpush1.bf16.msra.mxu0 0
        %1007 = vmatprep.subr.bf16.mxu0 0
        %1008 = vmatpush1.bf16.msra.mxu0 0
        %1009 = vmatprep.subr.bf16.mxu0 0
        %1010 = vmatpush1.bf16.msra.mxu0 0
        %1011 = vmatprep.subr.bf16.mxu0 0
        %1012 = vmatpush1.bf16.msra.mxu0 0
        %1013 = vmatprep.subr.bf16.mxu0 0
        %1014 = vmatpush1.bf16.msra.mxu0 0
        %1015 = vmatprep.subr.bf16.mxu0 0
        %1016 = vmatpush1.bf16.msra.mxu0 0
        %1017 = vmatprep.subr.bf16.mxu0 0
        %1018 = vmatpush1.bf16.msra.mxu0 0
        %1019 = vmatprep.subr.bf16.mxu0 0
        %1020 = vmatpush1.bf16.msra.mxu0 0
        %1021 = vmatprep.subr.bf16.mxu0 0
        %1022 = vmatpush1.bf16.msra.mxu0 0
        %1023 = vmatprep.subr.bf16.mxu0 0
        %1024 = vmatpush1.bf16.msra.mxu0 0
        %1025 = vmatprep.subr.bf16.mxu0 0
        %1026 = vmatpush1.bf16.msra.mxu0 0
        %1027 = vmatprep.mubr.bf16.mxu0 0
        %1028 = vmatmul.mubr.bf16.gmra.mrb[0].mxu0 %v990
        %v1029 = vpop.f32.mrb[0].mxu0
        %v1030 = vadd.f32 %v963, %v1029
        %v1031 = vpop.f32.mrb[0].mxu0
        %v1032 = vpop.f32.mrb[0].mxu0
        %v1033 = vadd.f32 %v966, %v1032
        %v1034 = vpop.f32.mrb[0].mxu0
        %1035 = vmatprep.mubr.bf16.mxu0 0
        %1036 = vmatmul.mubr.bf16.gmra.mrb[0].mxu0 %v993
        %v1037 = vpop.f32.mrb[0].mxu0
        %v1038 = vadd.f32 %v971, %v1037
        %v1039 = vpop.f32.mrb[0].mxu0
        %v1040 = vpop.f32.mrb[0].mxu0
        %v1041 = vadd.f32 %v974, %v1040
        %v1042 = vpop.f32.mrb[0].mxu0
        %1043 = vdwg.mxu0
        %v1044 = vld [vmem:[#allocation5] sm:$0x1]
        %v1046 = vlaneseq
        %v1047 = vshrl.u32 %v1046, 7
        %v1048 = vsub.s32 0, %v1047
        %v1049 = vrot.slane %v1044, %v1048
        %v1051 = vadd.f32 %v1030, %v1049
        %v1052 = vadd.f32 %v1033, %v1049
        %v1053 = vadd.f32 %v1038, %v1049
        %v1054 = vadd.f32 %v1041, %v1049
        %v1055 = vxor.u32 %v1051, 2147483648
        %v1056 = vxor.u32 %v1052, 2147483648
        %v1057 = vxor.u32 %v1053, 2147483648
        %v1058 = vxor.u32 %v1054, 2147483648
        %v1059 = vmul.f32 %v1055, 1.442695
        %v1060 = vpow.pop %v1059
        %v1061 = vmul.f32 %v1056, 1.442695
        %v1062 = vpow.pop %v1061
        %v1063 = vmul.f32 %v1057, 1.442695
        %v1064 = vpow.pop %v1063
        %v1065 = vmul.f32 %v1058, 1.442695
        %v1066 = vpow.pop %v1065
        %v1067 = vadd.f32 %v1060, 1.0
        %v1068 = vadd.f32 %v1062, 1.0
        %v1069 = vadd.f32 %v1064, 1.0
        %v1070 = vadd.f32 %v1066, 1.0
        %v1071 = vrcp.pop %v1067
        %v1072 = vmul.f32 1.0, %v1071
        %v1073 = vrcp.pop %v1068
        %v1074 = vmul.f32 1.0, %v1073
        %v1075 = vrcp.pop %v1069
        %v1076 = vmul.f32 1.0, %v1075
        %v1077 = vrcp.pop %v1070
        %v1078 = vmul.f32 1.0, %v1077
        %v1079 = vtanh.pop %v1051
        %v1080 = vtanh.pop %v1052
        %v1081 = vtanh.pop %v1053
        %v1082 = vtanh.pop %v1054
        %v1083 = vld [vmem:[#allocation3] sm:$0xff]
        %v1084 = vld [vmem:[#allocation3 + $0x8] sm:$0xff]
        %v1085 = vld [vmem:[#allocation3 + $0x10] sm:$0xff]
        %v1086 = vld [vmem:[#allocation3 + $0x18] sm:$0xff]
        %1091 = vrot.lane.b32.xlu0 %v1083, 32
        %v1092 = vpop.permute.xlu0 %1091
        %1093 = vrot.lane.b32.xlu0 %v1084, 32
        %v1094 = vpop.permute.xlu0 %1093
        %1095 = vrot.lane.b32.xlu0 %v1085, 32
        %v1096 = vpop.permute.xlu0 %1095
        %1097 = vrot.lane.b32.xlu0 %v1086, 32
        %v1098 = vpop.permute.xlu0 %1097
        %v1103 = vmul.f32 %v1072, %v1092
        %v1104 = vmul.f32 %v1074, %v1094
        %v1105 = vmul.f32 %v1076, %v1096
        %v1106 = vmul.f32 %v1078, %v1098
        %1111 = vrot.lane.b32.xlu0 %v1079, 32
        %v1112 = vpop.permute.xlu0 %1111
        %1113 = vrot.lane.b32.xlu0 %v1080, 32
        %v1114 = vpop.permute.xlu0 %1113
        %1115 = vrot.lane.b32.xlu0 %v1081, 32
        %v1116 = vpop.permute.xlu0 %1115
        %1117 = vrot.lane.b32.xlu0 %v1082, 32
        %v1118 = vpop.permute.xlu0 %1117
        %v1123 = vmul.f32 %v1072, %v1112
        %v1124 = vmul.f32 %v1074, %v1114
        %v1125 = vmul.f32 %v1076, %v1116
        %v1126 = vmul.f32 %v1078, %v1118
        %1131 = vrot.lane.b32.xlu0 %v1123, 32
        %v1132 = vpop.permute.xlu0 %1131
        %1133 = vrot.lane.b32.xlu0 %v1124, 32
        %v1134 = vpop.permute.xlu0 %1133
        %1135 = vrot.lane.b32.xlu0 %v1125, 32
        %v1136 = vpop.permute.xlu0 %1135
        %1137 = vrot.lane.b32.xlu0 %v1126, 32
        %v1138 = vpop.permute.xlu0 %1137
        %v1143 = vadd.f32 %v1103, %v1132
        %v1144 = vadd.f32 %v1104, %v1134
        %v1145 = vadd.f32 %v1105, %v1136
        %v1146 = vadd.f32 %v1106, %v1138
        %v1147 = vtanh.pop %v1143
        %v1148 = vtanh.pop %v1144
        %v1149 = vtanh.pop %v1145
        %v1150 = vtanh.pop %v1146
        %1155 = vrot.lane.b32.xlu0 %v1147, 32
        %v1156 = vpop.permute.xlu0 %1155
        %1157 = vrot.lane.b32.xlu0 %v1148, 32
        %v1158 = vpop.permute.xlu0 %1157
        %1159 = vrot.lane.b32.xlu0 %v1149, 32
        %v1160 = vpop.permute.xlu0 %1159
        %1161 = vrot.lane.b32.xlu0 %v1150, 32
        %v1162 = vpop.permute.xlu0 %1161
        %v1167 = vmul.f32 %v1072, %v1156
        %v1168 = vmul.f32 %v1074, %v1158
        %v1169 = vmul.f32 %v1076, %v1160
        %v1170 = vmul.f32 %v1078, %v1162
        %1175 = vrot.lane.b32.xlu0 %v1167, 64
        %v1176 = vpop.permute.xlu0 %1175
        %1177 = vrot.lane.b32.xlu0 %v1168, 64
        %v1178 = vpop.permute.xlu0 %1177
        %1179 = vrot.lane.b32.xlu0 %v1169, 64
        %v1180 = vpop.permute.xlu0 %1179
        %1181 = vrot.lane.b32.xlu0 %v1170, 64
        %v1182 = vpop.permute.xlu0 %1181
        %1187 = vst.msk [vmem:[#allocation2] sm:$0xff] %vm820, %v1176
        %1188 = vst.msk [vmem:[#allocation2 + $0x8] sm:$0xff] %vm820, %v1178
        %1189 = vst.msk [vmem:[#allocation2 + $0x10] sm:$0xff] %vm820, %v1180
        %1190 = vst.msk [vmem:[#allocation2 + $0x18] sm:$0xff] %vm820, %v1182
        %1195 = vrot.lane.b32.xlu0 %v1143, 96
        %v1196 = vpop.permute.xlu0 %1195
        %1197 = vrot.lane.b32.xlu0 %v1144, 96
        %v1198 = vpop.permute.xlu0 %1197
        %1199 = vrot.lane.b32.xlu0 %v1145, 96
        %v1200 = vpop.permute.xlu0 %1199
        %1201 = vrot.lane.b32.xlu0 %v1146, 96
        %v1202 = vpop.permute.xlu0 %1201
        %1207 = vst.msk [vmem:[#allocation3] sm:$0xff] %vm820, %v1196
        %1208 = vst.msk [vmem:[#allocation3 + $0x8] sm:$0xff] %vm820, %v1198
        %1209 = vst.msk [vmem:[#allocation3 + $0x10] sm:$0xff] %vm820, %v1200
        %1210 = vst.msk [vmem:[#allocation3 + $0x18] sm:$0xff] %vm820, %v1202
        %p1211 = scmp.eq.s32.totalorder %s34, 3
        // Predicated region
        $region138: #{tpu_custom_call.1} parent=116 // pred_check
          %p1212 = pneg %p1211
        $region139: #{tpu_custom_call.1} parent=116 // pred_check_branch
          %1214 = sbr.rel (%p1212) target = $region141
        $region140: #{tpu_custom_call.1} parent=116 // pred_region
          %v1215 = vmul.f32 %v1167, 0.5
          %v1216 = vmul.f32 %v1168, 0.5
          %v1217 = vmul.f32 %v1169, 0.5
          %v1218 = vmul.f32 %v1170, 0.5
          %v1219 = vmul.f32 %v1167, 0.70710677
          %v1220 = vmul.f32 %v1168, 0.70710677
          %v1221 = vmul.f32 %v1169, 0.70710677
          %v1222 = vmul.f32 %v1170, 0.70710677
          %vm1223 = vcmp.ge.f32.partialorder %v1219, 0.0
          %vm1224 = vcmp.ge.f32.partialorder %v1220, 0.0
          %vm1225 = vcmp.ge.f32.partialorder %v1221, 0.0
          %vm1226 = vcmp.ge.f32.partialorder %v1222, 0.0
          %v1227 = vsel %vm1223, 1.0, -1.0
          %v1228 = vsel %vm1224, 1.0, -1.0
          %v1229 = vsel %vm1225, 1.0, -1.0
          %v1230 = vsel %vm1226, 1.0, -1.0
          %v1231 = vand.u32 2147483647, %v1219
          %v1232 = vand.u32 2147483647, %v1220
          %v1233 = vand.u32 2147483647, %v1221
          %v1234 = vand.u32 2147483647, %v1222
          %v1235 = vmul.f32 %v1231, 0.3275911
          %v1236 = vmul.f32 %v1232, 0.3275911
          %v1237 = vmul.f32 %v1233, 0.3275911
          %v1238 = vmul.f32 %v1234, 0.3275911
          %v1239 = vadd.f32 %v1235, 1.0
          %v1240 = vadd.f32 %v1236, 1.0
          %v1241 = vadd.f32 %v1237, 1.0
          %v1242 = vadd.f32 %v1238, 1.0
          %v1243 = vrcp.pop %v1239
          %v1244 = vmul.f32 1.0, %v1243
          %v1245 = vrcp.pop %v1240
          %v1246 = vmul.f32 1.0, %v1245
          %v1247 = vrcp.pop %v1241
          %v1248 = vmul.f32 1.0, %v1247
          %v1249 = vrcp.pop %v1242
          %v1250 = vmul.f32 1.0, %v1249
          %v1251 = vmul.f32 %v1244, 1.0614054
          %v1252 = vmul.f32 %v1246, 1.0614054
          %v1253 = vmul.f32 %v1248, 1.0614054
          %v1254 = vmul.f32 %v1250, 1.0614054
          %v1255 = vadd.f32 %v1251, -1.4531521
          %v1256 = vadd.f32 %v1252, -1.4531521
          %v1257 = vadd.f32 %v1253, -1.4531521
          %v1258 = vadd.f32 %v1254, -1.4531521
          %v1259 = vmul.f32 %v1244, %v1255
          %v1260 = vmul.f32 %v1246, %v1256
          %v1261 = vmul.f32 %v1248, %v1257
          %v1262 = vmul.f32 %v1250, %v1258
          %v1263 = vadd.f32 %v1259, 1.4214138
          %v1264 = vadd.f32 %v1260, 1.4214138
          %v1265 = vadd.f32 %v1261, 1.4214138
          %v1266 = vadd.f32 %v1262, 1.4214138
          %v1267 = vmul.f32 %v1244, %v1263
          %v1268 = vmul.f32 %v1246, %v1264
          %v1269 = vmul.f32 %v1248, %v1265
          %v1270 = vmul.f32 %v1250, %v1266
          %v1271 = vadd.f32 %v1267, -0.28449672
          %v1272 = vadd.f32 %v1268, -0.28449672
          %v1273 = vadd.f32 %v1269, -0.28449672
          %v1274 = vadd.f32 %v1270, -0.28449672
          %v1275 = vmul.f32 %v1244, %v1271
          %v1276 = vmul.f32 %v1246, %v1272
          %v1277 = vmul.f32 %v1248, %v1273
          %v1278 = vmul.f32 %v1250, %v1274
          %v1279 = vadd.f32 %v1275, 0.2548296
          %v1280 = vadd.f32 %v1276, 0.2548296
          %v1281 = vadd.f32 %v1277, 0.2548296
          %v1282 = vadd.f32 %v1278, 0.2548296
          %v1283 = vmul.f32 %v1244, %v1279
          %v1284 = vmul.f32 %v1246, %v1280
          %v1285 = vmul.f32 %v1248, %v1281
          %v1286 = vmul.f32 %v1250, %v1282
          %v1287 = vsub.f32 0.0, %v1231
          %v1288 = vsub.f32 0.0, %v1232
          %v1289 = vsub.f32 0.0, %v1233
          %v1290 = vsub.f32 0.0, %v1234
          %v1291 = vmul.f32 %v1287, %v1231
          %v1292 = vmul.f32 %v1288, %v1232
          %v1293 = vmul.f32 %v1289, %v1233
          %v1294 = vmul.f32 %v1290, %v1234
          %v1295 = vmul.f32 %v1291, 1.442695
          %v1296 = vpow.pop %v1295
          %v1297 = vmul.f32 %v1292, 1.442695
          %v1298 = vpow.pop %v1297
          %v1299 = vmul.f32 %v1293, 1.442695
          %v1300 = vpow.pop %v1299
          %v1301 = vmul.f32 %v1294, 1.442695
          %v1302 = vpow.pop %v1301
          %v1303 = vmul.f32 %v1283, %v1296
          %v1304 = vmul.f32 %v1284, %v1298
          %v1305 = vmul.f32 %v1285, %v1300
          %v1306 = vmul.f32 %v1286, %v1302
          %v1307 = vsub.f32 1.0, %v1303
          %v1308 = vsub.f32 1.0, %v1304
          %v1309 = vsub.f32 1.0, %v1305
          %v1310 = vsub.f32 1.0, %v1306
          %v1311 = vmul.f32 %v1227, %v1307
          %v1312 = vmul.f32 %v1228, %v1308
          %v1313 = vmul.f32 %v1229, %v1309
          %v1314 = vmul.f32 %v1230, %v1310
          %v1315 = vadd.f32 %v1311, 1.0
          %v1316 = vadd.f32 %v1312, 1.0
          %v1317 = vadd.f32 %v1313, 1.0
          %v1318 = vadd.f32 %v1314, 1.0
          %v1319 = vmul.f32 %v1215, %v1315
          %v1320 = vmul.f32 %v1216, %v1316
          %v1321 = vmul.f32 %v1217, %v1317
          %v1322 = vmul.f32 %v1218, %v1318
          %v1323 = vpack.c.bf16 %v1320, %v1319
          %v1324 = vpack.c.bf16 %v1322, %v1321
          %v1325 = vld [vmem:[%s13] sm:$0xf]
          %v1326 = vld [vmem:[%s13 + $0x4] sm:$0xf]
          %v1327 = vld [vmem:[%s13 + $0x8] sm:$0xf]
          %v1328 = vld [vmem:[%s13 + $0xc] sm:$0xf]
          %v1329 = vld [vmem:[%s14] sm:$0x1]
          %v1331 = vlaneseq
          %v1332 = vshrl.u32 %v1331, 7
          %v1333 = vsub.s32 0, %v1332
          %v1334 = vrot.slane %v1329, %v1333
          %1338 = vrot.lane.b32.xlu0 %v1323, 64
          %v1339 = vpop.permute.xlu0 %1338
          %1340 = vrot.lane.b32.xlu0 %v1324, 64
          %v1341 = vpop.permute.xlu0 %1340
          %v1346 = vunpack.c.l.b16 %v1325
          %v1347 = vunpack.c.l.b16 %v1326
          %v1348 = vunpack.c.l.b16 %v1327
          %v1349 = vunpack.c.l.b16 %v1328
          %v1350 = vpack.c.b16 %v1347, %v1346
          %v1351 = vpack.c.b16 %v1349, %v1348
          %v1355 = vsel %vm820, %v1339, 0
          %v1358 = vsel %vm820, %v1341, 0
          %1360 = vmatprep.subr.bf16.mxu0 0
          %1361 = vmatpush1.bf16.msra.mxu0 %v1350
          %1362 = vmatprep.subr.bf16.mxu0 0
          %1363 = vmatpush1.bf16.msra.mxu0 %v1351
          %1364 = vmatprep.subr.bf16.mxu0 0
          %1365 = vmatpush1.bf16.msra.mxu0 0
          %1366 = vmatprep.subr.bf16.mxu0 0
          %1367 = vmatpush1.bf16.msra.mxu0 0
          %1368 = vmatprep.subr.bf16.mxu0 0
          %1369 = vmatpush1.bf16.msra.mxu0 0
          %1370 = vmatprep.subr.bf16.mxu0 0
          %1371 = vmatpush1.bf16.msra.mxu0 0
          %1372 = vmatprep.subr.bf16.mxu0 0
          %1373 = vmatpush1.bf16.msra.mxu0 0
          %1374 = vmatprep.subr.bf16.mxu0 0
          %1375 = vmatpush1.bf16.msra.mxu0 0
          %1376 = vmatprep.subr.bf16.mxu0 0
          %1377 = vmatpush1.bf16.msra.mxu0 0
          %1378 = vmatprep.subr.bf16.mxu0 0
          %1379 = vmatpush1.bf16.msra.mxu0 0
          %1380 = vmatprep.subr.bf16.mxu0 0
          %1381 = vmatpush1.bf16.msra.mxu0 0
          %1382 = vmatprep.subr.bf16.mxu0 0
          %1383 = vmatpush1.bf16.msra.mxu0 0
          %1384 = vmatprep.subr.bf16.mxu0 0
          %1385 = vmatpush1.bf16.msra.mxu0 0
          %1386 = vmatprep.subr.bf16.mxu0 0
          %1387 = vmatpush1.bf16.msra.mxu0 0
          %1388 = vmatprep.subr.bf16.mxu0 0
          %1389 = vmatpush1.bf16.msra.mxu0 0
          %1390 = vmatprep.subr.bf16.mxu0 0
          %1391 = vmatpush1.bf16.msra.mxu0 0
          %1392 = vmatprep.mubr.bf16.mxu0 0
          %1393 = vmatmul.mubr.bf16.gmra.mrb[0].mxu0 %v1355
          %v1394 = vpop.f32.mrb[0].mxu0
          %v1395 = vadd.f32 %v1334, %v1394
          %v1396 = vpop.f32.mrb[0].mxu0
          %v1397 = vpop.f32.mrb[0].mxu0
          %v1398 = vadd.f32 %v1334, %v1397
          %v1399 = vpop.f32.mrb[0].mxu0
          %1400 = vmatprep.mubr.bf16.mxu0 0
          %1401 = vmatmul.mubr.bf16.gmra.mrb[0].mxu0 %v1358
          %v1402 = vpop.f32.mrb[0].mxu0
          %v1403 = vadd.f32 %v1334, %v1402
          %v1404 = vpop.f32.mrb[0].mxu0
          %v1405 = vpop.f32.mrb[0].mxu0
          %v1406 = vadd.f32 %v1334, %v1405
          %v1407 = vpop.f32.mrb[0].mxu0
          %1408 = vdwg.mxu0
          %v1409 = vxor.u32 %v1395, 2147483648
          %v1410 = vxor.u32 %v1398, 2147483648
          %v1411 = vxor.u32 %v1403, 2147483648
          %v1412 = vxor.u32 %v1406, 2147483648
          %v1413 = vmul.f32 %v1409, 1.442695
          %v1414 = vpow.pop %v1413
          %v1415 = vmul.f32 %v1410, 1.442695
          %v1416 = vpow.pop %v1415
          %v1417 = vmul.f32 %v1411, 1.442695
          %v1418 = vpow.pop %v1417
          %v1419 = vmul.f32 %v1412, 1.442695
          %v1420 = vpow.pop %v1419
          %v1421 = vadd.f32 %v1414, 1.0
          %v1422 = vadd.f32 %v1416, 1.0
          %v1423 = vadd.f32 %v1418, 1.0
          %v1424 = vadd.f32 %v1420, 1.0
          %v1425 = vrcp.pop %v1421
          %v1426 = vmul.f32 1.0, %v1425
          %v1427 = vrcp.pop %v1422
          %v1428 = vmul.f32 1.0, %v1427
          %v1429 = vrcp.pop %v1423
          %v1430 = vmul.f32 1.0, %v1429
          %v1431 = vrcp.pop %v1424
          %v1432 = vmul.f32 1.0, %v1431
          %1437 = vrot.lane.b32.xlu0 %v1426, 96
          %v1438 = vpop.permute.xlu0 %1437
          %1439 = vrot.lane.b32.xlu0 %v1428, 96
          %v1440 = vpop.permute.xlu0 %1439
          %1441 = vrot.lane.b32.xlu0 %v1430, 96
          %v1442 = vpop.permute.xlu0 %1441
          %1443 = vrot.lane.b32.xlu0 %v1432, 96
          %v1444 = vpop.permute.xlu0 %1443
          %v1449 = vmul.f32 %v1395, %v1438
          %v1450 = vmul.f32 %v1398, %v1440
          %v1451 = vmul.f32 %v1403, %v1442
          %v1452 = vmul.f32 %v1406, %v1444
          %v1453 = vld [vmem:[#allocation8] sm:$0x1]
          %v1454 = vld [vmem:[#allocation10] sm:$0x1]
          %v1456 = vlaneseq
          %v1457 = vshrl.u32 %v1456, 7
          %v1458 = vsub.s32 0, %v1457
          %v1459 = vrot.slane %v1453, %v1458
          %v1461 = vmul.f32 %v870, %v1459
          %v1462 = vmul.f32 %v871, %v1459
          %v1463 = vmul.f32 %v872, %v1459
          %v1464 = vmul.f32 %v873, %v1459
          %v1466 = vlaneseq
          %v1467 = vshrl.u32 %v1466, 7
          %v1468 = vsub.s32 0, %v1467
          %v1469 = vrot.slane %v1454, %v1468
          %v1471 = vadd.f32 %v1461, %v1469
          %v1472 = vadd.f32 %v1462, %v1469
          %v1473 = vadd.f32 %v1463, %v1469
          %v1474 = vadd.f32 %v1464, %v1469
          %v1475 = vpack.c.bf16 %v1472, %v1471
          %v1476 = vpack.c.bf16 %v1474, %v1473
          %v1477 = vld [vmem:[%s9] sm:$0xf]
          %v1478 = vld [vmem:[%s9 + $0x4] sm:$0xf]
          %v1479 = vld [vmem:[%s9 + $0x8] sm:$0xf]
          %v1480 = vld [vmem:[%s9 + $0xc] sm:$0xf]
          %v1481 = vld [vmem:[%s10] sm:$0x1]
          %v1483 = vlaneseq
          %v1484 = vshrl.u32 %v1483, 7
          %v1485 = vsub.s32 0, %v1484
          %v1486 = vrot.slane %v1481, %v1485
          %v1492 = vunpack.c.l.b16 %v1477
          %v1493 = vunpack.c.l.b16 %v1478
          %v1494 = vunpack.c.l.b16 %v1479
          %v1495 = vunpack.c.l.b16 %v1480
          %v1496 = vpack.c.b16 %v1493, %v1492
          %v1497 = vpack.c.b16 %v1495, %v1494
          %v1501 = vsel %vm820, %v1475, 0
          %v1504 = vsel %vm820, %v1476, 0
          %1506 = vmatprep.subr.bf16.mxu0 0
          %1507 = vmatpush1.bf16.msra.mxu0 %v1496
          %1508 = vmatprep.subr.bf16.mxu0 0
          %1509 = vmatpush1.bf16.msra.mxu0 %v1497
          %1510 = vmatprep.subr.bf16.mxu0 0
          %1511 = vmatpush1.bf16.msra.mxu0 0
          %1512 = vmatprep.subr.bf16.mxu0 0
          %1513 = vmatpush1.bf16.msra.mxu0 0
          %1514 = vmatprep.subr.bf16.mxu0 0
          %1515 = vmatpush1.bf16.msra.mxu0 0
          %1516 = vmatprep.subr.bf16.mxu0 0
          %1517 = vmatpush1.bf16.msra.mxu0 0
          %1518 = vmatprep.subr.bf16.mxu0 0
          %1519 = vmatpush1.bf16.msra.mxu0 0
          %1520 = vmatprep.subr.bf16.mxu0 0
          %1521 = vmatpush1.bf16.msra.mxu0 0
          %1522 = vmatprep.subr.bf16.mxu0 0
          %1523 = vmatpush1.bf16.msra.mxu0 0
          %1524 = vmatprep.subr.bf16.mxu0 0
          %1525 = vmatpush1.bf16.msra.mxu0 0
          %1526 = vmatprep.subr.bf16.mxu0 0
          %1527 = vmatpush1.bf16.msra.mxu0 0
          %1528 = vmatprep.subr.bf16.mxu0 0
          %1529 = vmatpush1.bf16.msra.mxu0 0
          %1530 = vmatprep.subr.bf16.mxu0 0
          %1531 = vmatpush1.bf16.msra.mxu0 0
          %1532 = vmatprep.subr.bf16.mxu0 0
          %1533 = vmatpush1.bf16.msra.mxu0 0
          %1534 = vmatprep.subr.bf16.mxu0 0
          %1535 = vmatpush1.bf16.msra.mxu0 0
          %1536 = vmatprep.subr.bf16.mxu0 0
          %1537 = vmatpush1.bf16.msra.mxu0 0
          %1538 = vmatprep.mubr.bf16.mxu0 0
          %1539 = vmatmul.mubr.bf16.gmra.mrb[0].mxu0 %v1501
          %v1540 = vpop.f32.mrb[0].mxu0
          %v1541 = vadd.f32 %v1486, %v1540
          %v1542 = vpop.f32.mrb[0].mxu0
          %v1543 = vpop.f32.mrb[0].mxu0
          %v1544 = vadd.f32 %v1486, %v1543
          %v1545 = vpop.f32.mrb[0].mxu0
          %1546 = vmatprep.mubr.bf16.mxu0 0
          %1547 = vmatmul.mubr.bf16.gmra.mrb[0].mxu0 %v1504
          %v1548 = vpop.f32.mrb[0].mxu0
          %v1549 = vadd.f32 %v1486, %v1548
          %v1550 = vpop.f32.mrb[0].mxu0
          %v1551 = vpop.f32.mrb[0].mxu0
          %v1552 = vadd.f32 %v1486, %v1551
          %v1553 = vpop.f32.mrb[0].mxu0
          %1554 = vdwg.mxu0
          %v1555 = vmul.f32 %v1541, 0.5
          %v1556 = vmul.f32 %v1544, 0.5
          %v1557 = vmul.f32 %v1549, 0.5
          %v1558 = vmul.f32 %v1552, 0.5
          %v1559 = vmul.f32 %v1541, 0.70710677
          %v1560 = vmul.f32 %v1544, 0.70710677
          %v1561 = vmul.f32 %v1549, 0.70710677
          %v1562 = vmul.f32 %v1552, 0.70710677
          %vm1563 = vcmp.ge.f32.partialorder %v1559, 0.0
          %vm1564 = vcmp.ge.f32.partialorder %v1560, 0.0
          %vm1565 = vcmp.ge.f32.partialorder %v1561, 0.0
          %vm1566 = vcmp.ge.f32.partialorder %v1562, 0.0
          %v1567 = vsel %vm1563, 1.0, -1.0
          %v1568 = vsel %vm1564, 1.0, -1.0
          %v1569 = vsel %vm1565, 1.0, -1.0
          %v1570 = vsel %vm1566, 1.0, -1.0
          %v1571 = vand.u32 2147483647, %v1559
          %v1572 = vand.u32 2147483647, %v1560
          %v1573 = vand.u32 2147483647, %v1561
          %v1574 = vand.u32 2147483647, %v1562
          %v1575 = vmul.f32 %v1571, 0.3275911
          %v1576 = vmul.f32 %v1572, 0.3275911
          %v1577 = vmul.f32 %v1573, 0.3275911
          %v1578 = vmul.f32 %v1574, 0.3275911
          %v1579 = vadd.f32 %v1575, 1.0
          %v1580 = vadd.f32 %v1576, 1.0
          %v1581 = vadd.f32 %v1577, 1.0
          %v1582 = vadd.f32 %v1578, 1.0
          %v1583 = vrcp.pop %v1579
          %v1584 = vmul.f32 1.0, %v1583
          %v1585 = vrcp.pop %v1580
          %v1586 = vmul.f32 1.0, %v1585
          %v1587 = vrcp.pop %v1581
          %v1588 = vmul.f32 1.0, %v1587
          %v1589 = vrcp.pop %v1582
          %v1590 = vmul.f32 1.0, %v1589
          %v1591 = vmul.f32 %v1584, 1.0614054
          %v1592 = vmul.f32 %v1586, 1.0614054
          %v1593 = vmul.f32 %v1588, 1.0614054
          %v1594 = vmul.f32 %v1590, 1.0614054
          %v1595 = vadd.f32 %v1591, -1.4531521
          %v1596 = vadd.f32 %v1592, -1.4531521
          %v1597 = vadd.f32 %v1593, -1.4531521
          %v1598 = vadd.f32 %v1594, -1.4531521
          %v1599 = vmul.f32 %v1584, %v1595
          %v1600 = vmul.f32 %v1586, %v1596
          %v1601 = vmul.f32 %v1588, %v1597
          %v1602 = vmul.f32 %v1590, %v1598
          %v1603 = vadd.f32 %v1599, 1.4214138
          %v1604 = vadd.f32 %v1600, 1.4214138
          %v1605 = vadd.f32 %v1601, 1.4214138
          %v1606 = vadd.f32 %v1602, 1.4214138
          %v1607 = vmul.f32 %v1584, %v1603
          %v1608 = vmul.f32 %v1586, %v1604
          %v1609 = vmul.f32 %v1588, %v1605
          %v1610 = vmul.f32 %v1590, %v1606
          %v1611 = vadd.f32 %v1607, -0.28449672
          %v1612 = vadd.f32 %v1608, -0.28449672
          %v1613 = vadd.f32 %v1609, -0.28449672
          %v1614 = vadd.f32 %v1610, -0.28449672
          %v1615 = vmul.f32 %v1584, %v1611
          %v1616 = vmul.f32 %v1586, %v1612
          %v1617 = vmul.f32 %v1588, %v1613
          %v1618 = vmul.f32 %v1590, %v1614
          %v1619 = vadd.f32 %v1615, 0.2548296
          %v1620 = vadd.f32 %v1616, 0.2548296
          %v1621 = vadd.f32 %v1617, 0.2548296
          %v1622 = vadd.f32 %v1618, 0.2548296
          %v1623 = vmul.f32 %v1584, %v1619
          %v1624 = vmul.f32 %v1586, %v1620
          %v1625 = vmul.f32 %v1588, %v1621
          %v1626 = vmul.f32 %v1590, %v1622
          %v1627 = vsub.f32 0.0, %v1571
          %v1628 = vsub.f32 0.0, %v1572
          %v1629 = vsub.f32 0.0, %v1573
          %v1630 = vsub.f32 0.0, %v1574
          %v1631 = vmul.f32 %v1627, %v1571
          %v1632 = vmul.f32 %v1628, %v1572
          %v1633 = vmul.f32 %v1629, %v1573
          %v1634 = vmul.f32 %v1630, %v1574
          %v1635 = vmul.f32 %v1631, 1.442695
          %v1636 = vpow.pop %v1635
          %v1637 = vmul.f32 %v1632, 1.442695
          %v1638 = vpow.pop %v1637
          %v1639 = vmul.f32 %v1633, 1.442695
          %v1640 = vpow.pop %v1639
          %v1641 = vmul.f32 %v1634, 1.442695
          %v1642 = vpow.pop %v1641
          %v1643 = vmul.f32 %v1623, %v1636
          %v1644 = vmul.f32 %v1624, %v1638
          %v1645 = vmul.f32 %v1625, %v1640
          %v1646 = vmul.f32 %v1626, %v1642
          %v1647 = vsub.f32 1.0, %v1643
          %v1648 = vsub.f32 1.0, %v1644
          %v1649 = vsub.f32 1.0, %v1645
          %v1650 = vsub.f32 1.0, %v1646
          %v1651 = vmul.f32 %v1567, %v1647
          %v1652 = vmul.f32 %v1568, %v1648
          %v1653 = vmul.f32 %v1569, %v1649
          %v1654 = vmul.f32 %v1570, %v1650
          %v1655 = vadd.f32 %v1651, 1.0
          %v1656 = vadd.f32 %v1652, 1.0
          %v1657 = vadd.f32 %v1653, 1.0
          %v1658 = vadd.f32 %v1654, 1.0
          %v1659 = vmul.f32 %v1555, %v1655
          %v1660 = vmul.f32 %v1556, %v1656
          %v1661 = vmul.f32 %v1557, %v1657
          %v1662 = vmul.f32 %v1558, %v1658
          %v1663 = vpack.c.bf16 %v1660, %v1659
          %v1664 = vpack.c.bf16 %v1662, %v1661
          %v1665 = vld [vmem:[%s11] sm:$0xf]
          %v1666 = vld [vmem:[%s11 + $0x4] sm:$0xf]
          %v1667 = vld [vmem:[%s11 + $0x8] sm:$0xf]
          %v1668 = vld [vmem:[%s11 + $0xc] sm:$0xf]
          %v1669 = vld [vmem:[%s12] sm:$0x1]
          %v1671 = vlaneseq
          %v1672 = vshrl.u32 %v1671, 7
          %v1673 = vsub.s32 0, %v1672
          %v1674 = vrot.slane %v1669, %v1673
          %v1680 = vunpack.c.l.b16 %v1665
          %v1681 = vunpack.c.l.b16 %v1666
          %v1682 = vunpack.c.l.b16 %v1667
          %v1683 = vunpack.c.l.b16 %v1668
          %v1684 = vpack.c.b16 %v1681, %v1680
          %v1685 = vpack.c.b16 %v1683, %v1682
          %v1689 = vsel %vm820, %v1663, 0
          %v1692 = vsel %vm820, %v1664, 0
          %1694 = vmatprep.subr.bf16.mxu0 0
          %1695 = vmatpush1.bf16.msra.mxu0 %v1684
          %1696 = vmatprep.subr.bf16.mxu0 0
          %1697 = vmatpush1.bf16.msra.mxu0 %v1685
          %1698 = vmatprep.subr.bf16.mxu0 0
          %1699 = vmatpush1.bf16.msra.mxu0 0
          %1700 = vmatprep.subr.bf16.mxu0 0
          %1701 = vmatpush1.bf16.msra.mxu0 0
          %1702 = vmatprep.subr.bf16.mxu0 0
          %1703 = vmatpush1.bf16.msra.mxu0 0
          %1704 = vmatprep.subr.bf16.mxu0 0
          %1705 = vmatpush1.bf16.msra.mxu0 0
          %1706 = vmatprep.subr.bf16.mxu0 0
          %1707 = vmatpush1.bf16.msra.mxu0 0
          %1708 = vmatprep.subr.bf16.mxu0 0
          %1709 = vmatpush1.bf16.msra.mxu0 0
          %1710 = vmatprep.subr.bf16.mxu0 0
          %1711 = vmatpush1.bf16.msra.mxu0 0
          %1712 = vmatprep.subr.bf16.mxu0 0
          %1713 = vmatpush1.bf16.msra.mxu0 0
          %1714 = vmatprep.subr.bf16.mxu0 0
          %1715 = vmatpush1.bf16.msra.mxu0 0
          %1716 = vmatprep.subr.bf16.mxu0 0
          %1717 = vmatpush1.bf16.msra.mxu0 0
          %1718 = vmatprep.subr.bf16.mxu0 0
          %1719 = vmatpush1.bf16.msra.mxu0 0
          %1720 = vmatprep.subr.bf16.mxu0 0
          %1721 = vmatpush1.bf16.msra.mxu0 0
          %1722 = vmatprep.subr.bf16.mxu0 0
          %1723 = vmatpush1.bf16.msra.mxu0 0
          %1724 = vmatprep.subr.bf16.mxu0 0
          %1725 = vmatpush1.bf16.msra.mxu0 0
          %1726 = vmatprep.mubr.bf16.mxu0 0
          %1727 = vmatmul.mubr.bf16.gmra.mrb[0].mxu0 %v1689
          %v1728 = vpop.f32.mrb[0].mxu0
          %v1729 = vadd.f32 %v1674, %v1728
          %v1730 = vpop.f32.mrb[0].mxu0
          %v1731 = vpop.f32.mrb[0].mxu0
          %v1732 = vadd.f32 %v1674, %v1731
          %v1733 = vpop.f32.mrb[0].mxu0
          %1734 = vmatprep.mubr.bf16.mxu0 0
          %1735 = vmatmul.mubr.bf16.gmra.mrb[0].mxu0 %v1692
          %v1736 = vpop.f32.mrb[0].mxu0
          %v1737 = vadd.f32 %v1674, %v1736
          %v1738 = vpop.f32.mrb[0].mxu0
          %v1739 = vpop.f32.mrb[0].mxu0
          %v1740 = vadd.f32 %v1674, %v1739
          %v1741 = vpop.f32.mrb[0].mxu0
          %1742 = vdwg.mxu0
          %v1743 = vadd.f32 %v1449, %v1729
          %v1744 = vadd.f32 %v1450, %v1732
          %v1745 = vadd.f32 %v1451, %v1737
          %v1746 = vadd.f32 %v1452, %v1740
          %v1747 = vadd.f32 %v1743, %v708
          %v1748 = vadd.f32 %v1744, %v713
          %v1749 = vadd.f32 %v1745, %v797
          %v1750 = vadd.f32 %v1746, %v802
          %1751 = vst.msk [vmem:[#allocation11] sm:$0xff] %vm820, %v1747
          %1752 = vst.msk [vmem:[#allocation11 + $0x8] sm:$0xff] %vm820, %v1748
          %1753 = vst.msk [vmem:[#allocation11 + $0x10] sm:$0xff] %vm820, %v1749
          %1754 = vst.msk [vmem:[#allocation11 + $0x18] sm:$0xff] %vm820, %v1750
        $region141: #{tpu_custom_call.1} parent=116 // pred_fallthru
          _
        // Predicated region
        $region142: #{tpu_custom_call.1} parent=116 // pred_check
          %p1755 = pneg %p388
        $region143: #{tpu_custom_call.1} parent=116 // pred_check_branch
          %1757 = sbr.rel (%p1755) target = $region145
        $region144: #{tpu_custom_call.1} parent=116 // pred_region
          %s1758 = smul.u32 4, %s33
          %s1760 = ssub.s32 512, 512
          %1761 = vsyncadd [#allocation7], %s1760
          %s1762 = smul.addr %s1758, 128
          %s1763 = scalar_lea.hbm %s15, %s1762
          %s1764 = sshll.u32 [#allocation11], 4
          %s1765 = int_to_ptr.vmem [resolvable:$true] %s1764
          %1770 = dma.vmem_to_hbm [thread:$0]  %s1765, 512, %s1763, [#allocation7], 128, 128, 8
        $region145: #{tpu_custom_call.1} parent=116 // pred_fallthru
          _
        // Predicated region
        $region146: #{tpu_custom_call.1} parent=116 // pred_check
          %p1771 = pneg %p388
        $region147: #{tpu_custom_call.1} parent=116 // pred_check_branch
          %1773 = sbr.rel (%p1771) target = $region149
        $region148: #{tpu_custom_call.1} parent=116 // pred_region
          %1774 = dma.done [#allocation7], 512
        $region149: #{tpu_custom_call.1} parent=116 // pred_fallthru
          _
      $region117: #{tpu_custom_call.1} parent=5 // pred_fallthru
        _
      %p1775 = scmp.le.s32.totalorder 2, %s24
      // Predicated region
      $region150: #{tpu_custom_call.1} parent=5 // pred_check
        %p1776 = pneg %p1775
      $region151: #{tpu_custom_call.1} parent=5 // pred_check_branch
        %1778 = sbr.rel (%p1776) target = $region153
      $region152: #{tpu_custom_call.1} parent=5 // pred_region
        %s1779 = ssub.s32 %s24, 2
      $region153: #{tpu_custom_call.1} parent=5 // pred_fallthru
        _
    $region6: #{tpu_custom_call.1} parent=1 // loop_footer
      %s28 = sadd.s32 1, %s24
    $region7: #{tpu_custom_call.1} parent=1 // loop_footer_branch
      %23 = sbr.rel target = $region3
    $region8: #{tpu_custom_call.1} parent=1 // loop_exit
      _
    %1780 = vsyncpa [#allocation6], 1
    %s1781 = scalar_lea.sflag [#allocation6], 1
    %1782 = vsyncpa %s1781, 1
    %1783 = vsyncpa [#allocation9], 1
    %1784 = vsyncpa [#allocation7], 1
    %s1785 = scalar_lea.sflag [#allocation7], 1
    %1786 = vsyncpa %s1785, 1

</llo_original>
